<compile_context>
chip_gen: v6e
topology: v6e:2x2x1
jax: 0.10.0
libtpu: 0.0.40
codegen_flags: <defaults>
</compile_context>

<pallas_src>
import jax
import jax.numpy as jnp
from jax.experimental import pallas as pl
from jax.experimental.pallas import tpu as pltpu

HID_SIZE = 64

_LANE = 128
_SUBLANE = 8
_DEFAULT_BATCH_TILE = 512        # multiple of 8; large enough to sit near HBM roofline
_SMALL_BATCH_FALLBACK = 128      # below this, plain XLA is as fast or faster


def _round_up(n, m):
    return ((n + m - 1) // m) * m


def _critic_kernel(x_ref, w1_ref, b1_ref, w2_ref, b2_ref, w3_ref, b3_ref, o_ref):
    # Layer 1: Linear(obs, H) + Tanh. MXU matmul (bf16/f32 inputs, f32 accumulation),
    # tanh on the EUP in f32.
    h1 = jnp.tanh(
        jnp.dot(x_ref[...], w1_ref[...], preferred_element_type=jnp.float32)
        + b1_ref[...]
    )
    # Layer 2: Linear(H, H) + Tanh.
    h2 = jnp.tanh(
        jnp.dot(h1.astype(w2_ref.dtype), w2_ref[...],
                preferred_element_type=jnp.float32)
        + b2_ref[...]
    )
    # Layer 3: Linear(H, R_pad). R is padded to a full 128-lane register in the wrapper,
    # so this store is a lane-dense, unmasked vst.
    o_ref[...] = (
        jnp.dot(h2.astype(w3_ref.dtype), w3_ref[...],
                preferred_element_type=jnp.float32)
        + b3_ref[...]
    ).astype(o_ref.dtype)


def reference_forward(x, p):
    h1 = jnp.tanh(x @ p["w1"] + p["b1"])
    h2 = jnp.tanh(h1 @ p["w2"] + p["b2"])
    return h2 @ p["w3"] + p["b3"]


def critic_forward(x, params, *, batch_tile=None, compute_dtype=jnp.bfloat16):
    """Fused MLP critic.

    x: (B, obs_size) float32
    params: dict with w1 (obs,H), b1 (1,H), w2 (H,H), b2 (1,H), w3 (H,R), b3 (1,R)
    """
    B, obs_size = x.shape
    H = params["w1"].shape[1]
    R = params["w3"].shape[1]

    # Tiny batches: kernel launch + DMA setup overhead exceeds the compute.
    if batch_tile is None and B <= _SMALL_BATCH_FALLBACK:
        return reference_forward(x, params)

    if batch_tile is None:
        batch_tile = min(_DEFAULT_BATCH_TILE, _round_up(B, _SUBLANE))
    assert batch_tile % _SUBLANE == 0, "batch_tile must be a multiple of 8 (f32 sublanes)"

    # Pad batch to a tile multiple (padded rows sliced off below) and pad R to 128 lanes.
    B_pad = _round_up(B, batch_tile)
    R_pad = _round_up(R, _LANE)

    x_c = x.astype(compute_dtype)
    if B_pad != B:
        x_c = jnp.pad(x_c, ((0, B_pad - B), (0, 0)))

    w1 = params["w1"].astype(compute_dtype)
    w2 = params["w2"].astype(compute_dtype)
    w3 = jnp.pad(params["w3"], ((0, 0), (0, R_pad - R))).astype(compute_dtype)
    b1 = params["b1"].astype(jnp.float32)
    b2 = params["b2"].astype(jnp.float32)
    b3 = jnp.pad(params["b3"], ((0, 0), (0, R_pad - R))).astype(jnp.float32)

    grid = (B_pad // batch_tile,)

    # x / output are tiled over the batch; parameters are broadcast (same block each
    # grid step). Feature-axis blocks equal the full array dims (obs_size, H) so the
    # (8,128) divisibility rule does not apply to them; R_pad is 128-divisible.
    in_specs = [
        pl.BlockSpec((batch_tile, obs_size), lambda i: (i, 0)),   # x
        pl.BlockSpec((obs_size, H), lambda i: (0, 0)),            # w1
        pl.BlockSpec((1, H), lambda i: (0, 0)),                   # b1
        pl.BlockSpec((H, H), lambda i: (0, 0)),                   # w2
        pl.BlockSpec((1, H), lambda i: (0, 0)),                   # b2
        pl.BlockSpec((H, R_pad), lambda i: (0, 0)),               # w3 (padded)
        pl.BlockSpec((1, R_pad), lambda i: (0, 0)),               # b3 (padded)
    ]
    out_spec = pl.BlockSpec((batch_tile, R_pad), lambda i: (i, 0))

    itemsize = jnp.dtype(compute_dtype).itemsize
    weight_bytes = (obs_size * H + H * H + H * R_pad) * itemsize + (2 * H + R_pad) * 4
    cost = pl.CostEstimate(
        flops=2 * B_pad * (obs_size * H + H * H + H * R_pad),
        transcendentals=2 * B_pad * H,
        bytes_accessed=B_pad * obs_size * itemsize + weight_bytes + B_pad * R_pad * 4,
    )

    # Conservative VMEM budget: double-buffered x/out tiles + resident weights +
    # f32 intermediates. Kept well under v7x's 32 MiB scoped default / 64 MiB physical.
    vmem_bytes = (
        2 * batch_tile * obs_size * itemsize   # x, double-buffered
        + 2 * batch_tile * R_pad * 4           # out, double-buffered
        + weight_bytes
        + 4 * batch_tile * H * 4               # f32 intermediates headroom
    )
    vmem_limit = int(min(max(2 * vmem_bytes, 4 << 20), 32 << 20))

    out_padded = pl.pallas_call(
        _critic_kernel,
        out_shape=jax.ShapeDtypeStruct((B_pad, R_pad), jnp.float32),
        grid_spec=pltpu.PrefetchScalarGridSpec(
            num_scalar_prefetch=0,
            grid=grid,
            in_specs=in_specs,
            out_specs=out_spec,
        ),
        compiler_params=pltpu.CompilerParams(
            dimension_semantics=("parallel",),   # batch axis -> megacore sharding on v7x
            vmem_limit_bytes=vmem_limit,
        ),
        cost_estimate=cost,
    )(x_c, w1, b1, w2, b2, w3, b3)

    return out_padded[:B, :R]


def init_params(key, obs_size, reward_size):
    """Deterministic init mimicking nn.Linear default (uniform(-1/sqrt(fan_in), +1/sqrt(fan_in)))."""
    keys = jax.random.split(key, 6)

    def linear(kw, kb, fan_in, fan_out):
        bound = 1.0 / jnp.sqrt(jnp.float32(fan_in))
        w = jax.random.uniform(kw, (fan_in, fan_out), jnp.float32, -bound, bound)
        b = jax.random.uniform(kb, (1, fan_out), jnp.float32, -bound, bound)
        return w, b

    w1, b1 = linear(keys[0], keys[1], obs_size, HID_SIZE)
    w2, b2 = linear(keys[2], keys[3], HID_SIZE, HID_SIZE)
    w3, b3 = linear(keys[4], keys[5], HID_SIZE, reward_size)
    return dict(w1=w1, b1=b1, w2=w2, b2=b2, w3=w3, b3=b3)


if __name__ == "__main__":
    obs_size = 32
    reward_size = 4

    key = jax.random.PRNGKey(0)
    k_x, k_p, k_xs = jax.random.split(key, 3)
    params = init_params(k_p, obs_size, reward_size)

    # Kernel path: batch large enough for 2 grid steps (pipelining; even #steps for v7x).
    batch = 1024
    x = jax.random.normal(k_x, (batch, obs_size), jnp.float32)
    ref = reference_forward(x, params)

    # Default (bf16 matmul inputs, f32 accumulation) — semantic check vs f32 reference.
    out = jax.block_until_ready(critic_forward(x, params))
    assert out.shape == (batch, reward_size)
    assert jnp.allclose(out, ref, atol=5e-2, rtol=5e-2), "bf16 kernel mismatch vs reference"

    # Full-f32 compute path — tight check.
    out_f32 = jax.block_until_ready(critic_forward(x, params, compute_dtype=jnp.float32))
    assert jnp.allclose(out_f32, ref, atol=1e-5, rtol=1e-5), "f32 kernel mismatch vs reference"

    # Small-batch fallback path (B <= 128 uses plain XLA).
    xs = jax.random.normal(k_xs, (8, obs_size), jnp.float32)
    outs = jax.block_until_ready(critic_forward(xs, params))
    refs = reference_forward(xs, params)
    assert outs.shape == (8, reward_size)
    assert jnp.allclose(outs, refs, atol=1e-5, rtol=1e-5), "small-batch path mismatch"

    print("KERNEL_OK")
</pallas_src>

<mosaic_0001>
module attributes {stable_mosaic.version = 11 : i64} {
  func.func @_critic_kernel(%arg0: i32, %arg1: memref<512x32xbf16, #tpu.memory_space<vmem>>, %arg2: memref<32x64xbf16, #tpu.memory_space<vmem>>, %arg3: memref<1x64xf32, #tpu.memory_space<vmem>>, %arg4: memref<64x64xbf16, #tpu.memory_space<vmem>>, %arg5: memref<1x64xf32, #tpu.memory_space<vmem>>, %arg6: memref<64x128xbf16, #tpu.memory_space<vmem>>, %arg7: memref<1x128xf32, #tpu.memory_space<vmem>>, %arg8: memref<512x128xf32, #tpu.memory_space<vmem>>) attributes {dimension_semantics = [#tpu.dimension_semantics<parallel>], iteration_bounds = array<i64: 2>, scalar_prefetch = 0 : i64, scratch_operands = 0 : i64, tpu.core_type = #tpu.core_type<tc>, window_params = [{transform_indices = @transform_0, window_bounds = array<i64: 512, 32>}, {pipeline_mode = #tpu.pipeline_mode<synchronous>, transform_indices = @transform_1, window_bounds = array<i64: 32, 64>}, {pipeline_mode = #tpu.pipeline_mode<synchronous>, transform_indices = @transform_2, window_bounds = array<i64: 1, 64>}, {pipeline_mode = #tpu.pipeline_mode<synchronous>, transform_indices = @transform_3, window_bounds = array<i64: 64, 64>}, {pipeline_mode = #tpu.pipeline_mode<synchronous>, transform_indices = @transform_4, window_bounds = array<i64: 1, 64>}, {pipeline_mode = #tpu.pipeline_mode<synchronous>, transform_indices = @transform_5, window_bounds = array<i64: 64, 128>}, {pipeline_mode = #tpu.pipeline_mode<synchronous>, transform_indices = @transform_6, window_bounds = array<i64: 1, 128>}, {transform_indices = @transform_7, window_bounds = array<i64: 512, 128>}]} {
    %c0 = arith.constant 0 : index
    %c0_0 = arith.constant 0 : index
    %0 = vector.load %arg1[%c0, %c0_0] : memref<512x32xbf16, #tpu.memory_space<vmem>>, vector<512x32xbf16>
    %c0_1 = arith.constant 0 : index
    %c0_2 = arith.constant 0 : index
    %1 = vector.load %arg2[%c0_1, %c0_2] : memref<32x64xbf16, #tpu.memory_space<vmem>>, vector<32x64xbf16>
    %cst = arith.constant dense<0.000000e+00> : vector<512x64xf32>
    %2 = tpu.matmul %0, %1, %cst {dimension_numbers = #tpu.dot_dimension_numbers<[1], [0], [0], [1], [0, 0, 1, 1], [], []>} : vector<512x32xbf16>, vector<32x64xbf16>, vector<512x64xf32> -> vector<512x64xf32>
    %c0_3 = arith.constant 0 : index
    %c0_4 = arith.constant 0 : index
    %3 = vector.load %arg3[%c0_3, %c0_4] : memref<1x64xf32, #tpu.memory_space<vmem>>, vector<1x64xf32>
    %4 = vector.broadcast %3 : vector<1x64xf32> to vector<512x64xf32>
    %5 = arith.addf %2, %4 : vector<512x64xf32>
    %6 = math.tanh %5 : vector<512x64xf32>
    %7 = arith.truncf %6 : vector<512x64xf32> to vector<512x64xbf16>
    %c0_5 = arith.constant 0 : index
    %c0_6 = arith.constant 0 : index
    %8 = vector.load %arg4[%c0_5, %c0_6] : memref<64x64xbf16, #tpu.memory_space<vmem>>, vector<64x64xbf16>
    %cst_7 = arith.constant dense<0.000000e+00> : vector<512x64xf32>
    %9 = tpu.matmul %7, %8, %cst_7 {dimension_numbers = #tpu.dot_dimension_numbers<[1], [0], [0], [1], [0, 0, 1, 1], [], []>} : vector<512x64xbf16>, vector<64x64xbf16>, vector<512x64xf32> -> vector<512x64xf32>
    %c0_8 = arith.constant 0 : index
    %c0_9 = arith.constant 0 : index
    %10 = vector.load %arg5[%c0_8, %c0_9] : memref<1x64xf32, #tpu.memory_space<vmem>>, vector<1x64xf32>
    %11 = vector.broadcast %10 : vector<1x64xf32> to vector<512x64xf32>
    %12 = arith.addf %9, %11 : vector<512x64xf32>
    %13 = math.tanh %12 : vector<512x64xf32>
    %14 = arith.truncf %13 : vector<512x64xf32> to vector<512x64xbf16>
    %c0_10 = arith.constant 0 : index
    %c0_11 = arith.constant 0 : index
    %15 = vector.load %arg6[%c0_10, %c0_11] : memref<64x128xbf16, #tpu.memory_space<vmem>>, vector<64x128xbf16>
    %cst_12 = arith.constant dense<0.000000e+00> : vector<512x128xf32>
    %16 = tpu.matmul %14, %15, %cst_12 {dimension_numbers = #tpu.dot_dimension_numbers<[1], [0], [0], [1], [0, 0, 1, 1], [], []>} : vector<512x64xbf16>, vector<64x128xbf16>, vector<512x128xf32> -> vector<512x128xf32>
    %c0_13 = arith.constant 0 : index
    %c0_14 = arith.constant 0 : index
    %17 = vector.load %arg7[%c0_13, %c0_14] : memref<1x128xf32, #tpu.memory_space<vmem>>, vector<1x128xf32>
    %18 = vector.broadcast %17 : vector<1x128xf32> to vector<512x128xf32>
    %19 = arith.addf %16, %18 : vector<512x128xf32>
    %c0_15 = arith.constant 0 : index
    %c0_16 = arith.constant 0 : index
    %20 = vector.load %arg8[%c0_15, %c0_16] : memref<512x128xf32, #tpu.memory_space<vmem>>, vector<512x128xf32>
    tpu.vector_store %arg8[%c0_15, %c0_16], %19 {strides = array<i32>} : memref<512x128xf32, #tpu.memory_space<vmem>>, vector<512x128xf32>,
    return
  }
  func.func @transform_0(%arg0: i32) -> (i32, i32) {
    %c0_i32 = arith.constant 0 : i32
    %c0_i32_0 = arith.constant 0 : i32
    return %arg0, %c0_i32 : i32, i32
  }
  func.func @transform_1(%arg0: i32) -> (i32, i32) {
    %c0_i32 = arith.constant 0 : i32
    %c0_i32_0 = arith.constant 0 : i32
    %c0_i32_1 = arith.constant 0 : i32
    return %c0_i32, %c0_i32_0 : i32, i32
  }
  func.func @transform_2(%arg0: i32) -> (i32, i32) {
    %c0_i32 = arith.constant 0 : i32
    %c0_i32_0 = arith.constant 0 : i32
    %c0_i32_1 = arith.constant 0 : i32
    return %c0_i32, %c0_i32_0 : i32, i32
  }
  func.func @transform_3(%arg0: i32) -> (i32, i32) {
    %c0_i32 = arith.constant 0 : i32
    %c0_i32_0 = arith.constant 0 : i32
    %c0_i32_1 = arith.constant 0 : i32
    return %c0_i32, %c0_i32_0 : i32, i32
  }
  func.func @transform_4(%arg0: i32) -> (i32, i32) {
    %c0_i32 = arith.constant 0 : i32
    %c0_i32_0 = arith.constant 0 : i32
    %c0_i32_1 = arith.constant 0 : i32
    return %c0_i32, %c0_i32_0 : i32, i32
  }
  func.func @transform_5(%arg0: i32) -> (i32, i32) {
    %c0_i32 = arith.constant 0 : i32
    %c0_i32_0 = arith.constant 0 : i32
    %c0_i32_1 = arith.constant 0 : i32
    return %c0_i32, %c0_i32_0 : i32, i32
  }
  func.func @transform_6(%arg0: i32) -> (i32, i32) {
    %c0_i32 = arith.constant 0 : i32
    %c0_i32_0 = arith.constant 0 : i32
    %c0_i32_1 = arith.constant 0 : i32
    return %c0_i32, %c0_i32_0 : i32, i32
  }
  func.func @transform_7(%arg0: i32) -> (i32, i32) {
    %c0_i32 = arith.constant 0 : i32
    %c0_i32_0 = arith.constant 0 : i32
    return %arg0, %c0_i32 : i32, i32
  }
}

</mosaic_0001>

<llo_original>
// kernel: tpu_custom_call.1
$region0: #{tpu_custom_call.1}
  #allocation0 [shape = 'u32[]', space=smem, size = 0x4, offset = 0x4, fixed_abs, tag = 'smem constant byte address 0x4 - core index']
  #allocation1 [shape = 'u32[144,128]{1,0:T(1,128)}', space=vmem, size = 0x12000, scoped, tag = 'internal scratch']
  %s0 = inlined_call_operand.vmem [shape: bf16[1024,32], index: 0, kind: input, shape index: {}]
  %s1 = inlined_call_operand.vmem [shape: bf16[32,64], index: 1, kind: input, shape index: {}]
  %s2 = inlined_call_operand.vmem [shape: f32[1,64], index: 2, kind: input, shape index: {}]
  %s3 = inlined_call_operand.vmem [shape: bf16[64,64], index: 3, kind: input, shape index: {}]
  %s4 = inlined_call_operand.vmem [shape: f32[1,64], index: 4, kind: input, shape index: {}]
  %s5 = inlined_call_operand.vmem [shape: bf16[64,128], index: 5, kind: input, shape index: {}]
  %s6 = inlined_call_operand.vmem [shape: f32[1,128], index: 6, kind: input, shape index: {}]
  %s7 = inlined_call_operand.hbm [shape: f32[1024,128], index: 7, kind: output, shape index: {}]
  %s8 = sld [smem:[#allocation0]]
  $region61: #{tpu_custom_call.1} parent=0
    _
  %s10 = ssub.s32 1, %s8
  %s11 = scalar_select 0, %s10, %s8
  $region1: #{tpu_custom_call.1} parent=0
    #allocation2 [shape = 'u8[524288]{0}', space=vmem, size = 0x80000, scoped, tag = 'output window, operand 0']
    #allocation3 [shape = 's32[2]{0}', space=sflag, size = 0x8, scoped, tag = 'scoped memory for tpu_custom_call.1']
    %12 = vsyncpa [#allocation3], 0
    %s13 = scalar_lea.sflag [#allocation3], 1
    %14 = vsyncpa %s13, 0
    loop: start=0, step=1, limit=4
    $region2: #{tpu_custom_call.1} parent=1 // loop_pre_header
      _
    $region3: #{tpu_custom_call.1} parent=1 // loop_header
      %s16 = sphi 0, %s20
      %p17 = scmp.ge.s32.totalorder %s16, 4
      %s26 = sphi 0, %s28
      %s29 = sphi 0, %s26
      %s30 = sphi 0, %s29
      %s46 = sphi 0, %s30
      %s50 = sphi 0, %s50
      %s52 = sphi 0, %s50
      %s53 = sphi 0, %s52
      %s67 = sphi 0, %s53
      %s71 = sphi 0, %s71
      %s73 = sphi 0, %s71
      %s74 = sphi 0, %s73
      %s88 = sphi 0, %s74
      %s92 = sphi 0, %s92
      %s94 = sphi 0, %s92
      %s95 = sphi 0, %s94
      %s109 = sphi 0, %s95
      %s113 = sphi 0, %s113
      %s115 = sphi 0, %s113
      %s116 = sphi 0, %s115
      %s130 = sphi 0, %s116
      %s134 = sphi 0, %s134
      %s136 = sphi 0, %s134
      %s137 = sphi 0, %s136
      %s151 = sphi 0, %s137
      %s155 = sphi 0, %s155
      %s157 = sphi 0, %s155
      %s158 = sphi 0, %s157
      %s172 = sphi 0, %s158
      %s178 = sphi 0, %s180
      %s181 = sphi 0, %s178
      %s182 = sphi 0, %s181
      %s198 = sphi 0, %s182
    $region4: #{tpu_custom_call.1} parent=1 // loop_header_branch
      %19 = sbr.rel (%p17) target = $region8
    $region5: #{tpu_custom_call.1} parent=1 // loop_body
      %s21 = ssub.s32 %s16, 1
      %s22 = ssub.s32 %s16, 2
      %s23 = sadd.s32 %s16, 1
      %s24 = ssub.s32 %s16, %s23
      %p25 = scmp.eq.s32.totalorder %s24, 0
      %s27 = sadd.s32 %s26, 1
      %s28 = scalar_select %p25, %s26, %s27
      %p31 = pneg %p25
      %p32 = scmp.eq.s32.totalorder %s16, 1
      %p33 = por %p31, %p32
      %p34 = scmp.ne.s32.totalorder %s26, %s29
      %p35 = scmp.eq.s32.totalorder %s16, 0
      %p36 = por %p34, %p35
      %p37 = scmp.ne.s32.totalorder %s26, %s29
      %p38 = scmp.eq.s32.totalorder %s21, 1
      %p39 = por %p37, %p38
      %p40 = scmp.ne.s32.totalorder %s29, %s30
      %p41 = scmp.eq.s32.totalorder %s21, 0
      %p42 = por %p40, %p41
      %p43 = scmp.ne.s32.totalorder %s29, %s30
      %p44 = scmp.eq.s32.totalorder %s22, 1
      %p45 = por %p43, %p44
      %p47 = scmp.ne.s32.totalorder %s30, %s46
      %p48 = scmp.eq.s32.totalorder %s22, 0
      %p49 = por %p47, %p48
      %s51 = sadd.s32 %s50, 1
      %p54 = scmp.eq.s32.totalorder %s16, 1
      %p55 = scmp.ne.s32.totalorder %s50, %s52
      %p56 = scmp.eq.s32.totalorder %s16, 0
      %p57 = por %p55, %p56
      %p58 = scmp.ne.s32.totalorder %s50, %s52
      %p59 = scmp.eq.s32.totalorder %s21, 1
      %p60 = por %p58, %p59
      %p61 = scmp.ne.s32.totalorder %s52, %s53
      %p62 = scmp.eq.s32.totalorder %s21, 0
      %p63 = por %p61, %p62
      %p64 = scmp.ne.s32.totalorder %s52, %s53
      %p65 = scmp.eq.s32.totalorder %s22, 1
      %p66 = por %p64, %p65
      %p68 = scmp.ne.s32.totalorder %s53, %s67
      %p69 = scmp.eq.s32.totalorder %s22, 0
      %p70 = por %p68, %p69
      %s72 = sadd.s32 %s71, 1
      %p75 = scmp.eq.s32.totalorder %s16, 1
      %p76 = scmp.ne.s32.totalorder %s71, %s73
      %p77 = scmp.eq.s32.totalorder %s16, 0
      %p78 = por %p76, %p77
      %p79 = scmp.ne.s32.totalorder %s71, %s73
      %p80 = scmp.eq.s32.totalorder %s21, 1
      %p81 = por %p79, %p80
      %p82 = scmp.ne.s32.totalorder %s73, %s74
      %p83 = scmp.eq.s32.totalorder %s21, 0
      %p84 = por %p82, %p83
      %p85 = scmp.ne.s32.totalorder %s73, %s74
      %p86 = scmp.eq.s32.totalorder %s22, 1
      %p87 = por %p85, %p86
      %p89 = scmp.ne.s32.totalorder %s74, %s88
      %p90 = scmp.eq.s32.totalorder %s22, 0
      %p91 = por %p89, %p90
      %s93 = sadd.s32 %s92, 1
      %p96 = scmp.eq.s32.totalorder %s16, 1
      %p97 = scmp.ne.s32.totalorder %s92, %s94
      %p98 = scmp.eq.s32.totalorder %s16, 0
      %p99 = por %p97, %p98
      %p100 = scmp.ne.s32.totalorder %s92, %s94
      %p101 = scmp.eq.s32.totalorder %s21, 1
      %p102 = por %p100, %p101
      %p103 = scmp.ne.s32.totalorder %s94, %s95
      %p104 = scmp.eq.s32.totalorder %s21, 0
      %p105 = por %p103, %p104
      %p106 = scmp.ne.s32.totalorder %s94, %s95
      %p107 = scmp.eq.s32.totalorder %s22, 1
      %p108 = por %p106, %p107
      %p110 = scmp.ne.s32.totalorder %s95, %s109
      %p111 = scmp.eq.s32.totalorder %s22, 0
      %p112 = por %p110, %p111
      %s114 = sadd.s32 %s113, 1
      %p117 = scmp.eq.s32.totalorder %s16, 1
      %p118 = scmp.ne.s32.totalorder %s113, %s115
      %p119 = scmp.eq.s32.totalorder %s16, 0
      %p120 = por %p118, %p119
      %p121 = scmp.ne.s32.totalorder %s113, %s115
      %p122 = scmp.eq.s32.totalorder %s21, 1
      %p123 = por %p121, %p122
      %p124 = scmp.ne.s32.totalorder %s115, %s116
      %p125 = scmp.eq.s32.totalorder %s21, 0
      %p126 = por %p124, %p125
      %p127 = scmp.ne.s32.totalorder %s115, %s116
      %p128 = scmp.eq.s32.totalorder %s22, 1
      %p129 = por %p127, %p128
      %p131 = scmp.ne.s32.totalorder %s116, %s130
      %p132 = scmp.eq.s32.totalorder %s22, 0
      %p133 = por %p131, %p132
      %s135 = sadd.s32 %s134, 1
      %p138 = scmp.eq.s32.totalorder %s16, 1
      %p139 = scmp.ne.s32.totalorder %s134, %s136
      %p140 = scmp.eq.s32.totalorder %s16, 0
      %p141 = por %p139, %p140
      %p142 = scmp.ne.s32.totalorder %s134, %s136
      %p143 = scmp.eq.s32.totalorder %s21, 1
      %p144 = por %p142, %p143
      %p145 = scmp.ne.s32.totalorder %s136, %s137
      %p146 = scmp.eq.s32.totalorder %s21, 0
      %p147 = por %p145, %p146
      %p148 = scmp.ne.s32.totalorder %s136, %s137
      %p149 = scmp.eq.s32.totalorder %s22, 1
      %p150 = por %p148, %p149
      %p152 = scmp.ne.s32.totalorder %s137, %s151
      %p153 = scmp.eq.s32.totalorder %s22, 0
      %p154 = por %p152, %p153
      %s156 = sadd.s32 %s155, 1
      %p159 = scmp.eq.s32.totalorder %s16, 1
      %p160 = scmp.ne.s32.totalorder %s155, %s157
      %p161 = scmp.eq.s32.totalorder %s16, 0
      %p162 = por %p160, %p161
      %p163 = scmp.ne.s32.totalorder %s155, %s157
      %p164 = scmp.eq.s32.totalorder %s21, 1
      %p165 = por %p163, %p164
      %p166 = scmp.ne.s32.totalorder %s157, %s158
      %p167 = scmp.eq.s32.totalorder %s21, 0
      %p168 = por %p166, %p167
      %p169 = scmp.ne.s32.totalorder %s157, %s158
      %p170 = scmp.eq.s32.totalorder %s22, 1
      %p171 = por %p169, %p170
      %p173 = scmp.ne.s32.totalorder %s158, %s172
      %p174 = scmp.eq.s32.totalorder %s22, 0
      %p175 = por %p173, %p174
      %s176 = ssub.s32 %s16, %s23
      %p177 = scmp.eq.s32.totalorder %s176, 0
      %s179 = sadd.s32 %s178, 1
      %s180 = scalar_select %p177, %s178, %s179
      %p183 = pneg %p177
      %p184 = scmp.eq.s32.totalorder %s16, 1
      %p185 = por %p183, %p184
      %p186 = scmp.ne.s32.totalorder %s178, %s181
      %p187 = scmp.eq.s32.totalorder %s16, 0
      %p188 = por %p186, %p187
      %p189 = scmp.ne.s32.totalorder %s178, %s181
      %p190 = scmp.eq.s32.totalorder %s21, 1
      %p191 = por %p189, %p190
      %p192 = scmp.ne.s32.totalorder %s181, %s182
      %p193 = scmp.eq.s32.totalorder %s21, 0
      %p194 = por %p192, %p193
      %p195 = scmp.ne.s32.totalorder %s181, %s182
      %p196 = scmp.eq.s32.totalorder %s22, 1
      %p197 = por %p195, %p196
      %p199 = scmp.ne.s32.totalorder %s182, %s198
      %p200 = scmp.eq.s32.totalorder %s22, 0
      %p201 = por %p199, %p200
      %p202 = scmp.le.s32.totalorder 1, %s16
      %p203 = scmp.lt.s32.totalorder %s16, 3
      %p204 = pnand %p202, %p203
      %p205 = pneg %p204
      // Predicated region
      $region9: #{tpu_custom_call.1} parent=5 // pred_check
        _
      $region10: #{tpu_custom_call.1} parent=5 // pred_check_branch
        %207 = sbr.rel (%p204) target = $region12
      $region11: #{tpu_custom_call.1} parent=5 // pred_region
        %s208 = ssub.s32 %s16, 1
        // Predicated region
        $region13: #{tpu_custom_call.1} parent=11 // pred_check
          %p209 = pneg %p63
        $region14: #{tpu_custom_call.1} parent=11 // pred_check_branch
          %211 = sbr.rel (%p209) target = $region16
        $region15: #{tpu_custom_call.1} parent=11 // pred_region
          _
        $region16: #{tpu_custom_call.1} parent=11 // pred_fallthru
          _
        // Predicated region
        $region17: #{tpu_custom_call.1} parent=11 // pred_check
          %p212 = pneg %p84
        $region18: #{tpu_custom_call.1} parent=11 // pred_check_branch
          %214 = sbr.rel (%p212) target = $region20
        $region19: #{tpu_custom_call.1} parent=11 // pred_region
          _
        $region20: #{tpu_custom_call.1} parent=11 // pred_fallthru
          _
        // Predicated region
        $region21: #{tpu_custom_call.1} parent=11 // pred_check
          %p215 = pneg %p105
        $region22: #{tpu_custom_call.1} parent=11 // pred_check_branch
          %217 = sbr.rel (%p215) target = $region24
        $region23: #{tpu_custom_call.1} parent=11 // pred_region
          _
        $region24: #{tpu_custom_call.1} parent=11 // pred_fallthru
          _
        // Predicated region
        $region25: #{tpu_custom_call.1} parent=11 // pred_check
          %p218 = pneg %p126
        $region26: #{tpu_custom_call.1} parent=11 // pred_check_branch
          %220 = sbr.rel (%p218) target = $region28
        $region27: #{tpu_custom_call.1} parent=11 // pred_region
          _
        $region28: #{tpu_custom_call.1} parent=11 // pred_fallthru
          _
        // Predicated region
        $region29: #{tpu_custom_call.1} parent=11 // pred_check
          %p221 = pneg %p147
        $region30: #{tpu_custom_call.1} parent=11 // pred_check_branch
          %223 = sbr.rel (%p221) target = $region32
        $region31: #{tpu_custom_call.1} parent=11 // pred_region
          _
        $region32: #{tpu_custom_call.1} parent=11 // pred_fallthru
          _
        // Predicated region
        $region33: #{tpu_custom_call.1} parent=11 // pred_check
          %p224 = pneg %p168
        $region34: #{tpu_custom_call.1} parent=11 // pred_check_branch
          %226 = sbr.rel (%p224) target = $region36
        $region35: #{tpu_custom_call.1} parent=11 // pred_region
          _
        $region36: #{tpu_custom_call.1} parent=11 // pred_fallthru
          _
      $region12: #{tpu_custom_call.1} parent=5 // pred_fallthru
        _
      %p227 = scmp.lt.s32.totalorder %s16, 2
      // Predicated region
      $region37: #{tpu_custom_call.1} parent=5 // pred_check
        %p228 = pneg %p227
      $region38: #{tpu_custom_call.1} parent=5 // pred_check_branch
        %230 = sbr.rel (%p228) target = $region40
      $region39: #{tpu_custom_call.1} parent=5 // pred_region
        // Predicated region
        $region41: #{tpu_custom_call.1} parent=39 // pred_check
          %p231 = pneg %p36
        $region42: #{tpu_custom_call.1} parent=39 // pred_check_branch
          %233 = sbr.rel (%p231) target = $region44
        $region43: #{tpu_custom_call.1} parent=39 // pred_region
          %s234 = smul.u32 64, %s16
          %p235 = scmp.lt.s32.totalorder %s234, 127
          %s236 = scalar_select %p235, %s234, 127
          %s237 = smul.addr %s236, 4
          %s238 = scalar_lea.vmem %s0, %s237
          %s239 = smul.u32 64, %s16
        $region44: #{tpu_custom_call.1} parent=39 // pred_fallthru
          _
      $region40: #{tpu_custom_call.1} parent=5 // pred_fallthru
        _
      %p240 = scmp.le.s32.totalorder 1, %s16
      %p241 = scmp.lt.s32.totalorder %s16, 3
      %p242 = pnand %p240, %p241
      %p243 = pneg %p242
      // Predicated region
      $region45: #{tpu_custom_call.1} parent=5 // pred_check
        _
      $region46: #{tpu_custom_call.1} parent=5 // pred_check_branch
        %245 = sbr.rel (%p242) target = $region48
      $region47: #{tpu_custom_call.1} parent=5 // pred_region
        %s246 = ssub.s32 %s16, 1
        %s247 = smul.u32 64, %s21
        %p248 = scmp.lt.s32.totalorder %s247, 127
        %s249 = scalar_select %p248, %s247, 127
        %s250 = smul.addr %s249, 4
        %s251 = scalar_lea.vmem %s0, %s250
        %p252 = pneg %p42
        %p253 = pneg %p39
        %p254 = pneg %p63
        %p255 = pneg %p60
        %p256 = pneg %p84
        %p257 = pneg %p81
        %p258 = pneg %p105
        %p259 = pneg %p102
        %p260 = pneg %p126
        %p261 = pneg %p123
        %p262 = pneg %p147
        %p263 = pneg %p144
        %p264 = pneg %p168
        %p265 = pneg %p165
        %p266 = pneg %p194
        %p267 = pneg %p191
        %s268 = sand.u32 %s181, 1
        %s269 = scalar_lea.sflag [#allocation3], %s268
        %s270 = sand.u32 %s181, 1
        %s271 = smul.addr %s270, 512
        %s272 = scalar_lea.vmem [#allocation2], %s271
        %s273 = smul.u32 64, %s21
        %p274 = scmp.lt.s32.totalorder %s273, 127
        %s275 = scalar_select %p274, %s273, 127
        %s276 = smul.addr %s275, 4
        %s277 = scalar_lea.vmem %s0, %s276
        %s278 = smul.u32 64, %s21
        %s279 = smul.u32 64, %s21
        %v281 = vld [vmem:[%s277] sm:$0xf]
        %v282 = vld [vmem:[%s277 + $0x4] sm:$0xf]
        %v283 = vld [vmem:[%s277 + $0x8] sm:$0xf]
        %v284 = vld [vmem:[%s277 + $0xc] sm:$0xf]
        %v285 = vld [vmem:[%s277 + $0x10] sm:$0xf]
        %v286 = vld [vmem:[%s277 + $0x14] sm:$0xf]
        %v287 = vld [vmem:[%s277 + $0x18] sm:$0xf]
        %v288 = vld [vmem:[%s277 + $0x1c] sm:$0xf]
        %v289 = vld [vmem:[%s277 + $0x20] sm:$0xf]
        %v290 = vld [vmem:[%s277 + $0x24] sm:$0xf]
        %v291 = vld [vmem:[%s277 + $0x28] sm:$0xf]
        %v292 = vld [vmem:[%s277 + $0x2c] sm:$0xf]
        %v293 = vld [vmem:[%s277 + $0x30] sm:$0xf]
        %v294 = vld [vmem:[%s277 + $0x34] sm:$0xf]
        %v295 = vld [vmem:[%s277 + $0x38] sm:$0xf]
        %v296 = vld [vmem:[%s277 + $0x3c] sm:$0xf]
        %v297 = vld [vmem:[%s277 + $0x40] sm:$0xf]
        %v298 = vld [vmem:[%s277 + $0x44] sm:$0xf]
        %v299 = vld [vmem:[%s277 + $0x48] sm:$0xf]
        %v300 = vld [vmem:[%s277 + $0x4c] sm:$0xf]
        %v301 = vld [vmem:[%s277 + $0x50] sm:$0xf]
        %v302 = vld [vmem:[%s277 + $0x54] sm:$0xf]
        %v303 = vld [vmem:[%s277 + $0x58] sm:$0xf]
        %v304 = vld [vmem:[%s277 + $0x5c] sm:$0xf]
        %v305 = vld [vmem:[%s277 + $0x60] sm:$0xf]
        %v306 = vld [vmem:[%s277 + $0x64] sm:$0xf]
        %v307 = vld [vmem:[%s277 + $0x68] sm:$0xf]
        %v308 = vld [vmem:[%s277 + $0x6c] sm:$0xf]
        %v309 = vld [vmem:[%s277 + $0x70] sm:$0xf]
        %v310 = vld [vmem:[%s277 + $0x74] sm:$0xf]
        %v311 = vld [vmem:[%s277 + $0x78] sm:$0xf]
        %v312 = vld [vmem:[%s277 + $0x7c] sm:$0xf]
        %v313 = vld [vmem:[%s277 + $0x80] sm:$0xf]
        %v314 = vld [vmem:[%s277 + $0x84] sm:$0xf]
        %v315 = vld [vmem:[%s277 + $0x88] sm:$0xf]
        %v316 = vld [vmem:[%s277 + $0x8c] sm:$0xf]
        %v317 = vld [vmem:[%s277 + $0x90] sm:$0xf]
        %v318 = vld [vmem:[%s277 + $0x94] sm:$0xf]
        %v319 = vld [vmem:[%s277 + $0x98] sm:$0xf]
        %v320 = vld [vmem:[%s277 + $0x9c] sm:$0xf]
        %v321 = vld [vmem:[%s277 + $0xa0] sm:$0xf]
        %v322 = vld [vmem:[%s277 + $0xa4] sm:$0xf]
        %v323 = vld [vmem:[%s277 + $0xa8] sm:$0xf]
        %v324 = vld [vmem:[%s277 + $0xac] sm:$0xf]
        %v325 = vld [vmem:[%s277 + $0xb0] sm:$0xf]
        %v326 = vld [vmem:[%s277 + $0xb4] sm:$0xf]
        %v327 = vld [vmem:[%s277 + $0xb8] sm:$0xf]
        %v328 = vld [vmem:[%s277 + $0xbc] sm:$0xf]
        %v329 = vld [vmem:[%s277 + $0xc0] sm:$0xf]
        %v330 = vld [vmem:[%s277 + $0xc4] sm:$0xf]
        %v331 = vld [vmem:[%s277 + $0xc8] sm:$0xf]
        %v332 = vld [vmem:[%s277 + $0xcc] sm:$0xf]
        %v333 = vld [vmem:[%s277 + $0xd0] sm:$0xf]
        %v334 = vld [vmem:[%s277 + $0xd4] sm:$0xf]
        %v335 = vld [vmem:[%s277 + $0xd8] sm:$0xf]
        %v336 = vld [vmem:[%s277 + $0xdc] sm:$0xf]
        %v337 = vld [vmem:[%s277 + $0xe0] sm:$0xf]
        %v338 = vld [vmem:[%s277 + $0xe4] sm:$0xf]
        %v339 = vld [vmem:[%s277 + $0xe8] sm:$0xf]
        %v340 = vld [vmem:[%s277 + $0xec] sm:$0xf]
        %v341 = vld [vmem:[%s277 + $0xf0] sm:$0xf]
        %v342 = vld [vmem:[%s277 + $0xf4] sm:$0xf]
        %v343 = vld [vmem:[%s277 + $0xf8] sm:$0xf]
        %v344 = vld [vmem:[%s277 + $0xfc] sm:$0xf]
        %v345 = vld [vmem:[%s1] sm:$0xf]
        %v346 = vld [vmem:[%s1 + $0x4] sm:$0xf]
        %v347 = vld [vmem:[%s1 + $0x8] sm:$0xf]
        %v348 = vld [vmem:[%s1 + $0xc] sm:$0xf]
        %v349 = vld [vmem:[%s2] sm:$0x1]
        %v351 = vlaneseq
        %v352 = vshrl.u32 %v351, 7
        %v353 = vsub.s32 0, %v352
        %v354 = vrot.slane %v349, %v353
        %v420 = vunpack.c.l.b16 %v281
        %v421 = vunpack.c.l.b16 %v282
        %v422 = vunpack.c.l.b16 %v283
        %v423 = vunpack.c.l.b16 %v284
        %v424 = vunpack.c.l.b16 %v285
        %v425 = vunpack.c.l.b16 %v286
        %v426 = vunpack.c.l.b16 %v287
        %v427 = vunpack.c.l.b16 %v288
        %v428 = vunpack.c.l.b16 %v289
        %v429 = vunpack.c.l.b16 %v290
        %v430 = vunpack.c.l.b16 %v291
        %v431 = vunpack.c.l.b16 %v292
        %v432 = vunpack.c.l.b16 %v293
        %v433 = vunpack.c.l.b16 %v294
        %v434 = vunpack.c.l.b16 %v295
        %v435 = vunpack.c.l.b16 %v296
        %v436 = vunpack.c.l.b16 %v297
        %v437 = vunpack.c.l.b16 %v298
        %v438 = vunpack.c.l.b16 %v299
        %v439 = vunpack.c.l.b16 %v300
        %v440 = vunpack.c.l.b16 %v301
        %v441 = vunpack.c.l.b16 %v302
        %v442 = vunpack.c.l.b16 %v303
        %v443 = vunpack.c.l.b16 %v304
        %v444 = vunpack.c.l.b16 %v305
        %v445 = vunpack.c.l.b16 %v306
        %v446 = vunpack.c.l.b16 %v307
        %v447 = vunpack.c.l.b16 %v308
        %v448 = vunpack.c.l.b16 %v309
        %v449 = vunpack.c.l.b16 %v310
        %v450 = vunpack.c.l.b16 %v311
        %v451 = vunpack.c.l.b16 %v312
        %v452 = vunpack.c.l.b16 %v313
        %v453 = vunpack.c.l.b16 %v314
        %v454 = vunpack.c.l.b16 %v315
        %v455 = vunpack.c.l.b16 %v316
        %v456 = vunpack.c.l.b16 %v317
        %v457 = vunpack.c.l.b16 %v318
        %v458 = vunpack.c.l.b16 %v319
        %v459 = vunpack.c.l.b16 %v320
        %v460 = vunpack.c.l.b16 %v321
        %v461 = vunpack.c.l.b16 %v322
        %v462 = vunpack.c.l.b16 %v323
        %v463 = vunpack.c.l.b16 %v324
        %v464 = vunpack.c.l.b16 %v325
        %v465 = vunpack.c.l.b16 %v326
        %v466 = vunpack.c.l.b16 %v327
        %v467 = vunpack.c.l.b16 %v328
        %v468 = vunpack.c.l.b16 %v329
        %v469 = vunpack.c.l.b16 %v330
        %v470 = vunpack.c.l.b16 %v331
        %v471 = vunpack.c.l.b16 %v332
        %v472 = vunpack.c.l.b16 %v333
        %v473 = vunpack.c.l.b16 %v334
        %v474 = vunpack.c.l.b16 %v335
        %v475 = vunpack.c.l.b16 %v336
        %v476 = vunpack.c.l.b16 %v337
        %v477 = vunpack.c.l.b16 %v338
        %v478 = vunpack.c.l.b16 %v339
        %v479 = vunpack.c.l.b16 %v340
        %v480 = vunpack.c.l.b16 %v341
        %v481 = vunpack.c.l.b16 %v342
        %v482 = vunpack.c.l.b16 %v343
        %v483 = vunpack.c.l.b16 %v344
        %v484 = vpack.c.b16 %v421, %v420
        %v485 = vpack.c.b16 %v423, %v422
        %v486 = vpack.c.b16 %v425, %v424
        %v487 = vpack.c.b16 %v427, %v426
        %v488 = vpack.c.b16 %v429, %v428
        %v489 = vpack.c.b16 %v431, %v430
        %v490 = vpack.c.b16 %v433, %v432
        %v491 = vpack.c.b16 %v435, %v434
        %v492 = vpack.c.b16 %v437, %v436
        %v493 = vpack.c.b16 %v439, %v438
        %v494 = vpack.c.b16 %v441, %v440
        %v495 = vpack.c.b16 %v443, %v442
        %v496 = vpack.c.b16 %v445, %v444
        %v497 = vpack.c.b16 %v447, %v446
        %v498 = vpack.c.b16 %v449, %v448
        %v499 = vpack.c.b16 %v451, %v450
        %v500 = vpack.c.b16 %v453, %v452
        %v501 = vpack.c.b16 %v455, %v454
        %v502 = vpack.c.b16 %v457, %v456
        %v503 = vpack.c.b16 %v459, %v458
        %v504 = vpack.c.b16 %v461, %v460
        %v505 = vpack.c.b16 %v463, %v462
        %v506 = vpack.c.b16 %v465, %v464
        %v507 = vpack.c.b16 %v467, %v466
        %v508 = vpack.c.b16 %v469, %v468
        %v509 = vpack.c.b16 %v471, %v470
        %v510 = vpack.c.b16 %v473, %v472
        %v511 = vpack.c.b16 %v475, %v474
        %v512 = vpack.c.b16 %v477, %v476
        %v513 = vpack.c.b16 %v479, %v478
        %v514 = vpack.c.b16 %v481, %v480
        %v515 = vpack.c.b16 %v483, %v482
        %v520 = vunpack.c.l.b16 %v345
        %v521 = vunpack.c.l.b16 %v346
        %v522 = vunpack.c.l.b16 %v347
        %v523 = vunpack.c.l.b16 %v348
        %v524 = vpack.c.b16 %v521, %v520
        %v525 = vpack.c.b16 %v523, %v522
        %vm528 = vcmask 261120
        %v530 = vsel %vm528, %v484, 0
        %v533 = vsel %vm528, %v485, 0
        %v536 = vsel %vm528, %v486, 0
        %v539 = vsel %vm528, %v487, 0
        %v542 = vsel %vm528, %v488, 0
        %v545 = vsel %vm528, %v489, 0
        %v548 = vsel %vm528, %v490, 0
        %v551 = vsel %vm528, %v491, 0
        %v554 = vsel %vm528, %v492, 0
        %v557 = vsel %vm528, %v493, 0
        %v560 = vsel %vm528, %v494, 0
        %v563 = vsel %vm528, %v495, 0
        %v566 = vsel %vm528, %v496, 0
        %v569 = vsel %vm528, %v497, 0
        %v572 = vsel %vm528, %v498, 0
        %v575 = vsel %vm528, %v499, 0
        %v578 = vsel %vm528, %v500, 0
        %v581 = vsel %vm528, %v501, 0
        %v584 = vsel %vm528, %v502, 0
        %v587 = vsel %vm528, %v503, 0
        %v590 = vsel %vm528, %v504, 0
        %v593 = vsel %vm528, %v505, 0
        %v596 = vsel %vm528, %v506, 0
        %v599 = vsel %vm528, %v507, 0
        %v602 = vsel %vm528, %v508, 0
        %v605 = vsel %vm528, %v509, 0
        %v608 = vsel %vm528, %v510, 0
        %v611 = vsel %vm528, %v511, 0
        %v614 = vsel %vm528, %v512, 0
        %v617 = vsel %vm528, %v513, 0
        %v620 = vsel %vm528, %v514, 0
        %v623 = vsel %vm528, %v515, 0
        %625 = vmatprep.subr.bf16.mxu0 0
        %626 = vmatpush1.bf16.msra.mxu0 0
        %627 = vmatprep.subr.bf16.mxu0 0
        %628 = vmatpush1.bf16.msra.mxu0 0
        %629 = vmatprep.subr.bf16.mxu0 0
        %630 = vmatpush1.bf16.msra.mxu0 0
        %631 = vmatprep.subr.bf16.mxu0 0
        %632 = vmatpush1.bf16.msra.mxu0 0
        %633 = vmatprep.subr.bf16.mxu0 0
        %634 = vmatpush1.bf16.msra.mxu0 0
        %635 = vmatprep.subr.bf16.mxu0 0
        %636 = vmatpush1.bf16.msra.mxu0 0
        %637 = vmatprep.subr.bf16.mxu0 0
        %638 = vmatpush1.bf16.msra.mxu0 %v525
        %639 = vmatprep.subr.bf16.mxu0 0
        %640 = vmatpush1.bf16.msra.mxu0 %v524
        %641 = vmatprep.subr.bf16.mxu0 0
        %642 = vmatpush2.bf16.msra.mxu0 0
        %643 = vmatprep.subr.bf16.mxu0 0
        %644 = vmatpush2.bf16.msra.mxu0 0
        %645 = vmatprep.subr.bf16.mxu0 0
        %646 = vmatpush2.bf16.msra.mxu0 0
        %647 = vmatprep.subr.bf16.mxu0 0
        %648 = vmatpush2.bf16.msra.mxu0 0
        %649 = vmatprep.subr.bf16.mxu0 0
        %650 = vmatpush2.bf16.msra.mxu0 0
        %651 = vmatprep.subr.bf16.mxu0 0
        %652 = vmatpush2.bf16.msra.mxu0 0
        %653 = vmatprep.subr.bf16.mxu0 0
        %654 = vmatpush2.bf16.msra.mxu0 0
        %655 = vmatprep.subr.bf16.mxu0 0
        %656 = vmatpush2.bf16.msra.mxu0 0
        %657 = vmatprep.mubr.bf16.mxu0 0
        %658 = vmatmul.mubr.bf16.gmra.mxu0 %v530
        %v659 = vpop.f32.mrf.mxu0
        %v660 = vadd.f32 %v354, %v659
        %v661 = vpop.f32.mrf.mxu0
        %v662 = vpop.f32.mrf.mxu0
        %v663 = vadd.f32 %v354, %v662
        %v664 = vpop.f32.mrf.mxu0
        %665 = vmatprep.mubr.bf16.mxu0 0
        %666 = vmatmul.mubr.bf16.gmra.mxu0 %v533
        %v667 = vpop.f32.mrf.mxu0
        %v668 = vadd.f32 %v354, %v667
        %v669 = vpop.f32.mrf.mxu0
        %v670 = vpop.f32.mrf.mxu0
        %v671 = vadd.f32 %v354, %v670
        %v672 = vpop.f32.mrf.mxu0
        %673 = vmatprep.mubr.bf16.mxu0 0
        %674 = vmatmul.mubr.bf16.gmra.mxu0 %v536
        %v675 = vpop.f32.mrf.mxu0
        %v676 = vadd.f32 %v354, %v675
        %v677 = vpop.f32.mrf.mxu0
        %v678 = vpop.f32.mrf.mxu0
        %v679 = vadd.f32 %v354, %v678
        %v680 = vpop.f32.mrf.mxu0
        %681 = vmatprep.mubr.bf16.mxu0 0
        %682 = vmatmul.mubr.bf16.gmra.mxu0 %v539
        %v683 = vpop.f32.mrf.mxu0
        %v684 = vadd.f32 %v354, %v683
        %v685 = vpop.f32.mrf.mxu0
        %v686 = vpop.f32.mrf.mxu0
        %v687 = vadd.f32 %v354, %v686
        %v688 = vpop.f32.mrf.mxu0
        %689 = vmatprep.mubr.bf16.mxu0 0
        %690 = vmatmul.mubr.bf16.gmra.mxu0 %v542
        %v691 = vpop.f32.mrf.mxu0
        %v692 = vadd.f32 %v354, %v691
        %v693 = vpop.f32.mrf.mxu0
        %v694 = vpop.f32.mrf.mxu0
        %v695 = vadd.f32 %v354, %v694
        %v696 = vpop.f32.mrf.mxu0
        %697 = vmatprep.mubr.bf16.mxu0 0
        %698 = vmatmul.mubr.bf16.gmra.mxu0 %v545
        %v699 = vpop.f32.mrf.mxu0
        %v700 = vadd.f32 %v354, %v699
        %v701 = vpop.f32.mrf.mxu0
        %v702 = vpop.f32.mrf.mxu0
        %v703 = vadd.f32 %v354, %v702
        %v704 = vpop.f32.mrf.mxu0
        %705 = vmatprep.mubr.bf16.mxu0 0
        %706 = vmatmul.mubr.bf16.gmra.mxu0 %v548
        %v707 = vpop.f32.mrf.mxu0
        %v708 = vadd.f32 %v354, %v707
        %v709 = vpop.f32.mrf.mxu0
        %v710 = vpop.f32.mrf.mxu0
        %v711 = vadd.f32 %v354, %v710
        %v712 = vpop.f32.mrf.mxu0
        %713 = vmatprep.mubr.bf16.mxu0 0
        %714 = vmatmul.mubr.bf16.gmra.mxu0 %v551
        %v715 = vpop.f32.mrf.mxu0
        %v716 = vadd.f32 %v354, %v715
        %v717 = vpop.f32.mrf.mxu0
        %v718 = vpop.f32.mrf.mxu0
        %v719 = vadd.f32 %v354, %v718
        %v720 = vpop.f32.mrf.mxu0
        %721 = vmatprep.mubr.bf16.mxu0 0
        %722 = vmatmul.mubr.bf16.gmra.mxu0 %v554
        %v723 = vpop.f32.mrf.mxu0
        %v724 = vadd.f32 %v354, %v723
        %v725 = vpop.f32.mrf.mxu0
        %v726 = vpop.f32.mrf.mxu0
        %v727 = vadd.f32 %v354, %v726
        %v728 = vpop.f32.mrf.mxu0
        %729 = vmatprep.mubr.bf16.mxu0 0
        %730 = vmatmul.mubr.bf16.gmra.mxu0 %v557
        %v731 = vpop.f32.mrf.mxu0
        %v732 = vadd.f32 %v354, %v731
        %v733 = vpop.f32.mrf.mxu0
        %v734 = vpop.f32.mrf.mxu0
        %v735 = vadd.f32 %v354, %v734
        %v736 = vpop.f32.mrf.mxu0
        %737 = vmatprep.mubr.bf16.mxu0 0
        %738 = vmatmul.mubr.bf16.gmra.mxu0 %v560
        %v739 = vpop.f32.mrf.mxu0
        %v740 = vadd.f32 %v354, %v739
        %v741 = vpop.f32.mrf.mxu0
        %v742 = vpop.f32.mrf.mxu0
        %v743 = vadd.f32 %v354, %v742
        %v744 = vpop.f32.mrf.mxu0
        %745 = vmatprep.mubr.bf16.mxu0 0
        %746 = vmatmul.mubr.bf16.gmra.mxu0 %v563
        %v747 = vpop.f32.mrf.mxu0
        %v748 = vadd.f32 %v354, %v747
        %v749 = vpop.f32.mrf.mxu0
        %v750 = vpop.f32.mrf.mxu0
        %v751 = vadd.f32 %v354, %v750
        %v752 = vpop.f32.mrf.mxu0
        %753 = vmatprep.mubr.bf16.mxu0 0
        %754 = vmatmul.mubr.bf16.gmra.mxu0 %v566
        %v755 = vpop.f32.mrf.mxu0
        %v756 = vadd.f32 %v354, %v755
        %v757 = vpop.f32.mrf.mxu0
        %v758 = vpop.f32.mrf.mxu0
        %v759 = vadd.f32 %v354, %v758
        %v760 = vpop.f32.mrf.mxu0
        %761 = vmatprep.mubr.bf16.mxu0 0
        %762 = vmatmul.mubr.bf16.gmra.mxu0 %v569
        %v763 = vpop.f32.mrf.mxu0
        %v764 = vadd.f32 %v354, %v763
        %v765 = vpop.f32.mrf.mxu0
        %v766 = vpop.f32.mrf.mxu0
        %v767 = vadd.f32 %v354, %v766
        %v768 = vpop.f32.mrf.mxu0
        %769 = vmatprep.mubr.bf16.mxu0 0
        %770 = vmatmul.mubr.bf16.gmra.mxu0 %v572
        %v771 = vpop.f32.mrf.mxu0
        %v772 = vadd.f32 %v354, %v771
        %v773 = vpop.f32.mrf.mxu0
        %v774 = vpop.f32.mrf.mxu0
        %v775 = vadd.f32 %v354, %v774
        %v776 = vpop.f32.mrf.mxu0
        %777 = vmatprep.mubr.bf16.mxu0 0
        %778 = vmatmul.mubr.bf16.gmra.mxu0 %v575
        %v779 = vpop.f32.mrf.mxu0
        %v780 = vadd.f32 %v354, %v779
        %v781 = vpop.f32.mrf.mxu0
        %v782 = vpop.f32.mrf.mxu0
        %v783 = vadd.f32 %v354, %v782
        %v784 = vpop.f32.mrf.mxu0
        %785 = vmatprep.mubr.bf16.mxu0 0
        %786 = vmatmul.mubr.bf16.gmra.mxu0 %v578
        %v787 = vpop.f32.mrf.mxu0
        %v788 = vadd.f32 %v354, %v787
        %v789 = vpop.f32.mrf.mxu0
        %v790 = vpop.f32.mrf.mxu0
        %v791 = vadd.f32 %v354, %v790
        %v792 = vpop.f32.mrf.mxu0
        %793 = vmatprep.mubr.bf16.mxu0 0
        %794 = vmatmul.mubr.bf16.gmra.mxu0 %v581
        %v795 = vpop.f32.mrf.mxu0
        %v796 = vadd.f32 %v354, %v795
        %v797 = vpop.f32.mrf.mxu0
        %v798 = vpop.f32.mrf.mxu0
        %v799 = vadd.f32 %v354, %v798
        %v800 = vpop.f32.mrf.mxu0
        %801 = vmatprep.mubr.bf16.mxu0 0
        %802 = vmatmul.mubr.bf16.gmra.mxu0 %v584
        %v803 = vpop.f32.mrf.mxu0
        %v804 = vadd.f32 %v354, %v803
        %v805 = vpop.f32.mrf.mxu0
        %v806 = vpop.f32.mrf.mxu0
        %v807 = vadd.f32 %v354, %v806
        %v808 = vpop.f32.mrf.mxu0
        %809 = vmatprep.mubr.bf16.mxu0 0
        %810 = vmatmul.mubr.bf16.gmra.mxu0 %v587
        %v811 = vpop.f32.mrf.mxu0
        %v812 = vadd.f32 %v354, %v811
        %v813 = vpop.f32.mrf.mxu0
        %v814 = vpop.f32.mrf.mxu0
        %v815 = vadd.f32 %v354, %v814
        %v816 = vpop.f32.mrf.mxu0
        %817 = vmatprep.mubr.bf16.mxu0 0
        %818 = vmatmul.mubr.bf16.gmra.mxu0 %v590
        %v819 = vpop.f32.mrf.mxu0
        %v820 = vadd.f32 %v354, %v819
        %v821 = vpop.f32.mrf.mxu0
        %v822 = vpop.f32.mrf.mxu0
        %v823 = vadd.f32 %v354, %v822
        %v824 = vpop.f32.mrf.mxu0
        %825 = vmatprep.mubr.bf16.mxu0 0
        %826 = vmatmul.mubr.bf16.gmra.mxu0 %v593
        %v827 = vpop.f32.mrf.mxu0
        %v828 = vadd.f32 %v354, %v827
        %v829 = vpop.f32.mrf.mxu0
        %v830 = vpop.f32.mrf.mxu0
        %v831 = vadd.f32 %v354, %v830
        %v832 = vpop.f32.mrf.mxu0
        %833 = vmatprep.mubr.bf16.mxu0 0
        %834 = vmatmul.mubr.bf16.gmra.mxu0 %v596
        %v835 = vpop.f32.mrf.mxu0
        %v836 = vadd.f32 %v354, %v835
        %v837 = vpop.f32.mrf.mxu0
        %v838 = vpop.f32.mrf.mxu0
        %v839 = vadd.f32 %v354, %v838
        %v840 = vpop.f32.mrf.mxu0
        %841 = vmatprep.mubr.bf16.mxu0 0
        %842 = vmatmul.mubr.bf16.gmra.mxu0 %v599
        %v843 = vpop.f32.mrf.mxu0
        %v844 = vadd.f32 %v354, %v843
        %v845 = vpop.f32.mrf.mxu0
        %v846 = vpop.f32.mrf.mxu0
        %v847 = vadd.f32 %v354, %v846
        %v848 = vpop.f32.mrf.mxu0
        %849 = vmatprep.mubr.bf16.mxu0 0
        %850 = vmatmul.mubr.bf16.gmra.mxu0 %v602
        %v851 = vpop.f32.mrf.mxu0
        %v852 = vadd.f32 %v354, %v851
        %v853 = vpop.f32.mrf.mxu0
        %v854 = vpop.f32.mrf.mxu0
        %v855 = vadd.f32 %v354, %v854
        %v856 = vpop.f32.mrf.mxu0
        %857 = vmatprep.mubr.bf16.mxu0 0
        %858 = vmatmul.mubr.bf16.gmra.mxu0 %v605
        %v859 = vpop.f32.mrf.mxu0
        %v860 = vadd.f32 %v354, %v859
        %v861 = vpop.f32.mrf.mxu0
        %v862 = vpop.f32.mrf.mxu0
        %v863 = vadd.f32 %v354, %v862
        %v864 = vpop.f32.mrf.mxu0
        %865 = vmatprep.mubr.bf16.mxu0 0
        %866 = vmatmul.mubr.bf16.gmra.mxu0 %v608
        %v867 = vpop.f32.mrf.mxu0
        %v868 = vadd.f32 %v354, %v867
        %v869 = vpop.f32.mrf.mxu0
        %v870 = vpop.f32.mrf.mxu0
        %v871 = vadd.f32 %v354, %v870
        %v872 = vpop.f32.mrf.mxu0
        %873 = vmatprep.mubr.bf16.mxu0 0
        %874 = vmatmul.mubr.bf16.gmra.mxu0 %v611
        %v875 = vpop.f32.mrf.mxu0
        %v876 = vadd.f32 %v354, %v875
        %v877 = vpop.f32.mrf.mxu0
        %v878 = vpop.f32.mrf.mxu0
        %v879 = vadd.f32 %v354, %v878
        %v880 = vpop.f32.mrf.mxu0
        %881 = vmatprep.mubr.bf16.mxu0 0
        %882 = vmatmul.mubr.bf16.gmra.mxu0 %v614
        %v883 = vpop.f32.mrf.mxu0
        %v884 = vadd.f32 %v354, %v883
        %v885 = vpop.f32.mrf.mxu0
        %v886 = vpop.f32.mrf.mxu0
        %v887 = vadd.f32 %v354, %v886
        %v888 = vpop.f32.mrf.mxu0
        %889 = vmatprep.mubr.bf16.mxu0 0
        %890 = vmatmul.mubr.bf16.gmra.mxu0 %v617
        %v891 = vpop.f32.mrf.mxu0
        %v892 = vadd.f32 %v354, %v891
        %v893 = vpop.f32.mrf.mxu0
        %v894 = vpop.f32.mrf.mxu0
        %v895 = vadd.f32 %v354, %v894
        %v896 = vpop.f32.mrf.mxu0
        %897 = vmatprep.mubr.bf16.mxu0 0
        %898 = vmatmul.mubr.bf16.gmra.mxu0 %v620
        %v899 = vpop.f32.mrf.mxu0
        %v900 = vadd.f32 %v354, %v899
        %v901 = vpop.f32.mrf.mxu0
        %v902 = vpop.f32.mrf.mxu0
        %v903 = vadd.f32 %v354, %v902
        %v904 = vpop.f32.mrf.mxu0
        %905 = vmatprep.mubr.bf16.mxu0 0
        %906 = vmatmul.mubr.bf16.gmra.mxu0 %v623
        %v907 = vpop.f32.mrf.mxu0
        %v908 = vadd.f32 %v354, %v907
        %v909 = vpop.f32.mrf.mxu0
        %v910 = vpop.f32.mrf.mxu0
        %v911 = vadd.f32 %v354, %v910
        %v912 = vpop.f32.mrf.mxu0
        %913 = vdwg.mxu0
        %v914 = vtanh.pop %v660
        %v915 = vtanh.pop %v663
        %v916 = vtanh.pop %v668
        %v917 = vtanh.pop %v671
        %v918 = vtanh.pop %v676
        %v919 = vtanh.pop %v679
        %v920 = vtanh.pop %v684
        %v921 = vtanh.pop %v687
        %v922 = vtanh.pop %v692
        %v923 = vtanh.pop %v695
        %v924 = vtanh.pop %v700
        %v925 = vtanh.pop %v703
        %v926 = vtanh.pop %v708
        %v927 = vtanh.pop %v711
        %v928 = vtanh.pop %v716
        %v929 = vtanh.pop %v719
        %v930 = vtanh.pop %v724
        %v931 = vtanh.pop %v727
        %v932 = vtanh.pop %v732
        %v933 = vtanh.pop %v735
        %v934 = vtanh.pop %v740
        %v935 = vtanh.pop %v743
        %v936 = vtanh.pop %v748
        %v937 = vtanh.pop %v751
        %v938 = vtanh.pop %v756
        %v939 = vtanh.pop %v759
        %v940 = vtanh.pop %v764
        %v941 = vtanh.pop %v767
        %v942 = vtanh.pop %v772
        %v943 = vtanh.pop %v775
        %v944 = vtanh.pop %v780
        %v945 = vtanh.pop %v783
        %v946 = vtanh.pop %v788
        %v947 = vtanh.pop %v791
        %v948 = vtanh.pop %v796
        %v949 = vtanh.pop %v799
        %v950 = vtanh.pop %v804
        %v951 = vtanh.pop %v807
        %v952 = vtanh.pop %v812
        %v953 = vtanh.pop %v815
        %v954 = vtanh.pop %v820
        %v955 = vtanh.pop %v823
        %v956 = vtanh.pop %v828
        %v957 = vtanh.pop %v831
        %v958 = vtanh.pop %v836
        %v959 = vtanh.pop %v839
        %v960 = vtanh.pop %v844
        %v961 = vtanh.pop %v847
        %v962 = vtanh.pop %v852
        %v963 = vtanh.pop %v855
        %v964 = vtanh.pop %v860
        %v965 = vtanh.pop %v863
        %v966 = vtanh.pop %v868
        %v967 = vtanh.pop %v871
        %v968 = vtanh.pop %v876
        %v969 = vtanh.pop %v879
        %v970 = vtanh.pop %v884
        %v971 = vtanh.pop %v887
        %v972 = vtanh.pop %v892
        %v973 = vtanh.pop %v895
        %v974 = vtanh.pop %v900
        %v975 = vtanh.pop %v903
        %v976 = vtanh.pop %v908
        %v977 = vtanh.pop %v911
        %v978 = vpack.c.bf16 %v915, %v914
        %v979 = vpack.c.bf16 %v917, %v916
        %v980 = vpack.c.bf16 %v919, %v918
        %v981 = vpack.c.bf16 %v921, %v920
        %v982 = vpack.c.bf16 %v923, %v922
        %v983 = vpack.c.bf16 %v925, %v924
        %v984 = vpack.c.bf16 %v927, %v926
        %v985 = vpack.c.bf16 %v929, %v928
        %v986 = vpack.c.bf16 %v931, %v930
        %v987 = vpack.c.bf16 %v933, %v932
        %v988 = vpack.c.bf16 %v935, %v934
        %v989 = vpack.c.bf16 %v937, %v936
        %v990 = vpack.c.bf16 %v939, %v938
        %v991 = vpack.c.bf16 %v941, %v940
        %v992 = vpack.c.bf16 %v943, %v942
        %v993 = vpack.c.bf16 %v945, %v944
        %v994 = vpack.c.bf16 %v947, %v946
        %v995 = vpack.c.bf16 %v949, %v948
        %v996 = vpack.c.bf16 %v951, %v950
        %v997 = vpack.c.bf16 %v953, %v952
        %v998 = vpack.c.bf16 %v955, %v954
        %v999 = vpack.c.bf16 %v957, %v956
        %v1000 = vpack.c.bf16 %v959, %v958
        %v1001 = vpack.c.bf16 %v961, %v960
        %v1002 = vpack.c.bf16 %v963, %v962
        %v1003 = vpack.c.bf16 %v965, %v964
        %v1004 = vpack.c.bf16 %v967, %v966
        %v1005 = vpack.c.bf16 %v969, %v968
        %v1006 = vpack.c.bf16 %v971, %v970
        %v1007 = vpack.c.bf16 %v973, %v972
        %v1008 = vpack.c.bf16 %v975, %v974
        %v1009 = vpack.c.bf16 %v977, %v976
        %v1010 = vld [vmem:[%s3] sm:$0xf]
        %v1011 = vld [vmem:[%s3 + $0x4] sm:$0xf]
        %v1012 = vld [vmem:[%s3 + $0x8] sm:$0xf]
        %v1013 = vld [vmem:[%s3 + $0xc] sm:$0xf]
        %v1014 = vld [vmem:[%s3 + $0x10] sm:$0xf]
        %v1015 = vld [vmem:[%s3 + $0x14] sm:$0xf]
        %v1016 = vld [vmem:[%s3 + $0x18] sm:$0xf]
        %v1017 = vld [vmem:[%s3 + $0x1c] sm:$0xf]
        %v1018 = vld [vmem:[%s4] sm:$0x1]
        %v1020 = vlaneseq
        %v1021 = vshrl.u32 %v1020, 7
        %v1022 = vsub.s32 0, %v1021
        %v1023 = vrot.slane %v1018, %v1022
        %v1033 = vunpack.c.l.b16 %v1010
        %v1034 = vunpack.c.l.b16 %v1011
        %v1035 = vunpack.c.l.b16 %v1012
        %v1036 = vunpack.c.l.b16 %v1013
        %v1037 = vunpack.c.l.b16 %v1014
        %v1038 = vunpack.c.l.b16 %v1015
        %v1039 = vunpack.c.l.b16 %v1016
        %v1040 = vunpack.c.l.b16 %v1017
        %v1041 = vpack.c.b16 %v1034, %v1033
        %v1042 = vpack.c.b16 %v1036, %v1035
        %v1043 = vpack.c.b16 %v1038, %v1037
        %v1044 = vpack.c.b16 %v1040, %v1039
        %vm1049 = vcmask 523264
        %v1051 = vsel %vm1049, %v978, 0
        %v1054 = vsel %vm1049, %v979, 0
        %v1057 = vsel %vm1049, %v980, 0
        %v1060 = vsel %vm1049, %v981, 0
        %v1063 = vsel %vm1049, %v982, 0
        %v1066 = vsel %vm1049, %v983, 0
        %v1069 = vsel %vm1049, %v984, 0
        %v1072 = vsel %vm1049, %v985, 0
        %v1075 = vsel %vm1049, %v986, 0
        %v1078 = vsel %vm1049, %v987, 0
        %v1081 = vsel %vm1049, %v988, 0
        %v1084 = vsel %vm1049, %v989, 0
        %v1087 = vsel %vm1049, %v990, 0
        %v1090 = vsel %vm1049, %v991, 0
        %v1093 = vsel %vm1049, %v992, 0
        %v1096 = vsel %vm1049, %v993, 0
        %v1099 = vsel %vm1049, %v994, 0
        %v1102 = vsel %vm1049, %v995, 0
        %v1105 = vsel %vm1049, %v996, 0
        %v1108 = vsel %vm1049, %v997, 0
        %v1111 = vsel %vm1049, %v998, 0
        %v1114 = vsel %vm1049, %v999, 0
        %v1117 = vsel %vm1049, %v1000, 0
        %v1120 = vsel %vm1049, %v1001, 0
        %v1123 = vsel %vm1049, %v1002, 0
        %v1126 = vsel %vm1049, %v1003, 0
        %v1129 = vsel %vm1049, %v1004, 0
        %v1132 = vsel %vm1049, %v1005, 0
        %v1135 = vsel %vm1049, %v1006, 0
        %v1138 = vsel %vm1049, %v1007, 0
        %v1141 = vsel %vm1049, %v1008, 0
        %v1144 = vsel %vm1049, %v1009, 0
        %1146 = vmatprep.subr.bf16.mxu0 0
        %1147 = vmatpush1.bf16.msra.mxu0 0
        %1148 = vmatprep.subr.bf16.mxu0 0
        %1149 = vmatpush1.bf16.msra.mxu0 0
        %1150 = vmatprep.subr.bf16.mxu0 0
        %1151 = vmatpush1.bf16.msra.mxu0 0
        %1152 = vmatprep.subr.bf16.mxu0 0
        %1153 = vmatpush1.bf16.msra.mxu0 0
        %1154 = vmatprep.subr.bf16.mxu0 0
        %1155 = vmatpush1.bf16.msra.mxu0 %v1044
        %1156 = vmatprep.subr.bf16.mxu0 0
        %1157 = vmatpush1.bf16.msra.mxu0 %v1043
        %1158 = vmatprep.subr.bf16.mxu0 0
        %1159 = vmatpush1.bf16.msra.mxu0 %v1042
        %1160 = vmatprep.subr.bf16.mxu0 0
        %1161 = vmatpush1.bf16.msra.mxu0 %v1041
        %1162 = vmatprep.subr.bf16.mxu0 0
        %1163 = vmatpush2.bf16.msra.mxu0 0
        %1164 = vmatprep.subr.bf16.mxu0 0
        %1165 = vmatpush2.bf16.msra.mxu0 0
        %1166 = vmatprep.subr.bf16.mxu0 0
        %1167 = vmatpush2.bf16.msra.mxu0 0
        %1168 = vmatprep.subr.bf16.mxu0 0
        %1169 = vmatpush2.bf16.msra.mxu0 0
        %1170 = vmatprep.subr.bf16.mxu0 0
        %1171 = vmatpush2.bf16.msra.mxu0 0
        %1172 = vmatprep.subr.bf16.mxu0 0
        %1173 = vmatpush2.bf16.msra.mxu0 0
        %1174 = vmatprep.subr.bf16.mxu0 0
        %1175 = vmatpush2.bf16.msra.mxu0 0
        %1176 = vmatprep.subr.bf16.mxu0 0
        %1177 = vmatpush2.bf16.msra.mxu0 0
        %1178 = vmatprep.mubr.bf16.mxu0 0
        %1179 = vmatmul.mubr.bf16.gmra.mxu0 %v1051
        %v1180 = vpop.f32.mrf.mxu0
        %v1181 = vadd.f32 %v1023, %v1180
        %v1182 = vpop.f32.mrf.mxu0
        %v1183 = vpop.f32.mrf.mxu0
        %v1184 = vadd.f32 %v1023, %v1183
        %v1185 = vpop.f32.mrf.mxu0
        %1186 = vmatprep.mubr.bf16.mxu0 0
        %1187 = vmatmul.mubr.bf16.gmra.mxu0 %v1054
        %v1188 = vpop.f32.mrf.mxu0
        %v1189 = vadd.f32 %v1023, %v1188
        %v1190 = vpop.f32.mrf.mxu0
        %v1191 = vpop.f32.mrf.mxu0
        %v1192 = vadd.f32 %v1023, %v1191
        %v1193 = vpop.f32.mrf.mxu0
        %1194 = vmatprep.mubr.bf16.mxu0 0
        %1195 = vmatmul.mubr.bf16.gmra.mxu0 %v1057
        %v1196 = vpop.f32.mrf.mxu0
        %v1197 = vadd.f32 %v1023, %v1196
        %v1198 = vpop.f32.mrf.mxu0
        %v1199 = vpop.f32.mrf.mxu0
        %v1200 = vadd.f32 %v1023, %v1199
        %v1201 = vpop.f32.mrf.mxu0
        %1202 = vmatprep.mubr.bf16.mxu0 0
        %1203 = vmatmul.mubr.bf16.gmra.mxu0 %v1060
        %v1204 = vpop.f32.mrf.mxu0
        %v1205 = vadd.f32 %v1023, %v1204
        %v1206 = vpop.f32.mrf.mxu0
        %v1207 = vpop.f32.mrf.mxu0
        %v1208 = vadd.f32 %v1023, %v1207
        %v1209 = vpop.f32.mrf.mxu0
        %1210 = vmatprep.mubr.bf16.mxu0 0
        %1211 = vmatmul.mubr.bf16.gmra.mxu0 %v1063
        %v1212 = vpop.f32.mrf.mxu0
        %v1213 = vadd.f32 %v1023, %v1212
        %v1214 = vpop.f32.mrf.mxu0
        %v1215 = vpop.f32.mrf.mxu0
        %v1216 = vadd.f32 %v1023, %v1215
        %v1217 = vpop.f32.mrf.mxu0
        %1218 = vmatprep.mubr.bf16.mxu0 0
        %1219 = vmatmul.mubr.bf16.gmra.mxu0 %v1066
        %v1220 = vpop.f32.mrf.mxu0
        %v1221 = vadd.f32 %v1023, %v1220
        %v1222 = vpop.f32.mrf.mxu0
        %v1223 = vpop.f32.mrf.mxu0
        %v1224 = vadd.f32 %v1023, %v1223
        %v1225 = vpop.f32.mrf.mxu0
        %1226 = vmatprep.mubr.bf16.mxu0 0
        %1227 = vmatmul.mubr.bf16.gmra.mxu0 %v1069
        %v1228 = vpop.f32.mrf.mxu0
        %v1229 = vadd.f32 %v1023, %v1228
        %v1230 = vpop.f32.mrf.mxu0
        %v1231 = vpop.f32.mrf.mxu0
        %v1232 = vadd.f32 %v1023, %v1231
        %v1233 = vpop.f32.mrf.mxu0
        %1234 = vmatprep.mubr.bf16.mxu0 0
        %1235 = vmatmul.mubr.bf16.gmra.mxu0 %v1072
        %v1236 = vpop.f32.mrf.mxu0
        %v1237 = vadd.f32 %v1023, %v1236
        %v1238 = vpop.f32.mrf.mxu0
        %v1239 = vpop.f32.mrf.mxu0
        %v1240 = vadd.f32 %v1023, %v1239
        %v1241 = vpop.f32.mrf.mxu0
        %1242 = vmatprep.mubr.bf16.mxu0 0
        %1243 = vmatmul.mubr.bf16.gmra.mxu0 %v1075
        %v1244 = vpop.f32.mrf.mxu0
        %v1245 = vadd.f32 %v1023, %v1244
        %v1246 = vpop.f32.mrf.mxu0
        %v1247 = vpop.f32.mrf.mxu0
        %v1248 = vadd.f32 %v1023, %v1247
        %v1249 = vpop.f32.mrf.mxu0
        %1250 = vmatprep.mubr.bf16.mxu0 0
        %1251 = vmatmul.mubr.bf16.gmra.mxu0 %v1078
        %v1252 = vpop.f32.mrf.mxu0
        %v1253 = vadd.f32 %v1023, %v1252
        %v1254 = vpop.f32.mrf.mxu0
        %v1255 = vpop.f32.mrf.mxu0
        %v1256 = vadd.f32 %v1023, %v1255
        %v1257 = vpop.f32.mrf.mxu0
        %1258 = vmatprep.mubr.bf16.mxu0 0
        %1259 = vmatmul.mubr.bf16.gmra.mxu0 %v1081
        %v1260 = vpop.f32.mrf.mxu0
        %v1261 = vadd.f32 %v1023, %v1260
        %v1262 = vpop.f32.mrf.mxu0
        %v1263 = vpop.f32.mrf.mxu0
        %v1264 = vadd.f32 %v1023, %v1263
        %v1265 = vpop.f32.mrf.mxu0
        %1266 = vmatprep.mubr.bf16.mxu0 0
        %1267 = vmatmul.mubr.bf16.gmra.mxu0 %v1084
        %v1268 = vpop.f32.mrf.mxu0
        %v1269 = vadd.f32 %v1023, %v1268
        %v1270 = vpop.f32.mrf.mxu0
        %v1271 = vpop.f32.mrf.mxu0
        %v1272 = vadd.f32 %v1023, %v1271
        %v1273 = vpop.f32.mrf.mxu0
        %1274 = vmatprep.mubr.bf16.mxu0 0
        %1275 = vmatmul.mubr.bf16.gmra.mxu0 %v1087
        %v1276 = vpop.f32.mrf.mxu0
        %v1277 = vadd.f32 %v1023, %v1276
        %v1278 = vpop.f32.mrf.mxu0
        %v1279 = vpop.f32.mrf.mxu0
        %v1280 = vadd.f32 %v1023, %v1279
        %v1281 = vpop.f32.mrf.mxu0
        %1282 = vmatprep.mubr.bf16.mxu0 0
        %1283 = vmatmul.mubr.bf16.gmra.mxu0 %v1090
        %v1284 = vpop.f32.mrf.mxu0
        %v1285 = vadd.f32 %v1023, %v1284
        %v1286 = vpop.f32.mrf.mxu0
        %v1287 = vpop.f32.mrf.mxu0
        %v1288 = vadd.f32 %v1023, %v1287
        %v1289 = vpop.f32.mrf.mxu0
        %1290 = vmatprep.mubr.bf16.mxu0 0
        %1291 = vmatmul.mubr.bf16.gmra.mxu0 %v1093
        %v1292 = vpop.f32.mrf.mxu0
        %v1293 = vadd.f32 %v1023, %v1292
        %v1294 = vpop.f32.mrf.mxu0
        %v1295 = vpop.f32.mrf.mxu0
        %v1296 = vadd.f32 %v1023, %v1295
        %v1297 = vpop.f32.mrf.mxu0
        %1298 = vmatprep.mubr.bf16.mxu0 0
        %1299 = vmatmul.mubr.bf16.gmra.mxu0 %v1096
        %v1300 = vpop.f32.mrf.mxu0
        %v1301 = vadd.f32 %v1023, %v1300
        %v1302 = vpop.f32.mrf.mxu0
        %v1303 = vpop.f32.mrf.mxu0
        %v1304 = vadd.f32 %v1023, %v1303
        %v1305 = vpop.f32.mrf.mxu0
        %1306 = vmatprep.mubr.bf16.mxu0 0
        %1307 = vmatmul.mubr.bf16.gmra.mxu0 %v1099
        %v1308 = vpop.f32.mrf.mxu0
        %v1309 = vadd.f32 %v1023, %v1308
        %v1310 = vpop.f32.mrf.mxu0
        %v1311 = vpop.f32.mrf.mxu0
        %v1312 = vadd.f32 %v1023, %v1311
        %v1313 = vpop.f32.mrf.mxu0
        %1314 = vmatprep.mubr.bf16.mxu0 0
        %1315 = vmatmul.mubr.bf16.gmra.mxu0 %v1102
        %v1316 = vpop.f32.mrf.mxu0
        %v1317 = vadd.f32 %v1023, %v1316
        %v1318 = vpop.f32.mrf.mxu0
        %v1319 = vpop.f32.mrf.mxu0
        %v1320 = vadd.f32 %v1023, %v1319
        %v1321 = vpop.f32.mrf.mxu0
        %1322 = vmatprep.mubr.bf16.mxu0 0
        %1323 = vmatmul.mubr.bf16.gmra.mxu0 %v1105
        %v1324 = vpop.f32.mrf.mxu0
        %v1325 = vadd.f32 %v1023, %v1324
        %v1326 = vpop.f32.mrf.mxu0
        %v1327 = vpop.f32.mrf.mxu0
        %v1328 = vadd.f32 %v1023, %v1327
        %v1329 = vpop.f32.mrf.mxu0
        %1330 = vmatprep.mubr.bf16.mxu0 0
        %1331 = vmatmul.mubr.bf16.gmra.mxu0 %v1108
        %v1332 = vpop.f32.mrf.mxu0
        %v1333 = vadd.f32 %v1023, %v1332
        %v1334 = vpop.f32.mrf.mxu0
        %v1335 = vpop.f32.mrf.mxu0
        %v1336 = vadd.f32 %v1023, %v1335
        %v1337 = vpop.f32.mrf.mxu0
        %1338 = vmatprep.mubr.bf16.mxu0 0
        %1339 = vmatmul.mubr.bf16.gmra.mxu0 %v1111
        %v1340 = vpop.f32.mrf.mxu0
        %v1341 = vadd.f32 %v1023, %v1340
        %v1342 = vpop.f32.mrf.mxu0
        %v1343 = vpop.f32.mrf.mxu0
        %v1344 = vadd.f32 %v1023, %v1343
        %v1345 = vpop.f32.mrf.mxu0
        %1346 = vmatprep.mubr.bf16.mxu0 0
        %1347 = vmatmul.mubr.bf16.gmra.mxu0 %v1114
        %v1348 = vpop.f32.mrf.mxu0
        %v1349 = vadd.f32 %v1023, %v1348
        %v1350 = vpop.f32.mrf.mxu0
        %v1351 = vpop.f32.mrf.mxu0
        %v1352 = vadd.f32 %v1023, %v1351
        %v1353 = vpop.f32.mrf.mxu0
        %1354 = vmatprep.mubr.bf16.mxu0 0
        %1355 = vmatmul.mubr.bf16.gmra.mxu0 %v1117
        %v1356 = vpop.f32.mrf.mxu0
        %v1357 = vadd.f32 %v1023, %v1356
        %v1358 = vpop.f32.mrf.mxu0
        %v1359 = vpop.f32.mrf.mxu0
        %v1360 = vadd.f32 %v1023, %v1359
        %v1361 = vpop.f32.mrf.mxu0
        %1362 = vmatprep.mubr.bf16.mxu0 0
        %1363 = vmatmul.mubr.bf16.gmra.mxu0 %v1120
        %v1364 = vpop.f32.mrf.mxu0
        %v1365 = vadd.f32 %v1023, %v1364
        %v1366 = vpop.f32.mrf.mxu0
        %v1367 = vpop.f32.mrf.mxu0
        %v1368 = vadd.f32 %v1023, %v1367
        %v1369 = vpop.f32.mrf.mxu0
        %1370 = vmatprep.mubr.bf16.mxu0 0
        %1371 = vmatmul.mubr.bf16.gmra.mxu0 %v1123
        %v1372 = vpop.f32.mrf.mxu0
        %v1373 = vadd.f32 %v1023, %v1372
        %v1374 = vpop.f32.mrf.mxu0
        %v1375 = vpop.f32.mrf.mxu0
        %v1376 = vadd.f32 %v1023, %v1375
        %v1377 = vpop.f32.mrf.mxu0
        %1378 = vmatprep.mubr.bf16.mxu0 0
        %1379 = vmatmul.mubr.bf16.gmra.mxu0 %v1126
        %v1380 = vpop.f32.mrf.mxu0
        %v1381 = vadd.f32 %v1023, %v1380
        %v1382 = vpop.f32.mrf.mxu0
        %v1383 = vpop.f32.mrf.mxu0
        %v1384 = vadd.f32 %v1023, %v1383
        %v1385 = vpop.f32.mrf.mxu0
        %1386 = vmatprep.mubr.bf16.mxu0 0
        %1387 = vmatmul.mubr.bf16.gmra.mxu0 %v1129
        %v1388 = vpop.f32.mrf.mxu0
        %v1389 = vadd.f32 %v1023, %v1388
        %v1390 = vpop.f32.mrf.mxu0
        %v1391 = vpop.f32.mrf.mxu0
        %v1392 = vadd.f32 %v1023, %v1391
        %v1393 = vpop.f32.mrf.mxu0
        %1394 = vmatprep.mubr.bf16.mxu0 0
        %1395 = vmatmul.mubr.bf16.gmra.mxu0 %v1132
        %v1396 = vpop.f32.mrf.mxu0
        %v1397 = vadd.f32 %v1023, %v1396
        %v1398 = vpop.f32.mrf.mxu0
        %v1399 = vpop.f32.mrf.mxu0
        %v1400 = vadd.f32 %v1023, %v1399
        %v1401 = vpop.f32.mrf.mxu0
        %1402 = vmatprep.mubr.bf16.mxu0 0
        %1403 = vmatmul.mubr.bf16.gmra.mxu0 %v1135
        %v1404 = vpop.f32.mrf.mxu0
        %v1405 = vadd.f32 %v1023, %v1404
        %v1406 = vpop.f32.mrf.mxu0
        %v1407 = vpop.f32.mrf.mxu0
        %v1408 = vadd.f32 %v1023, %v1407
        %v1409 = vpop.f32.mrf.mxu0
        %1410 = vmatprep.mubr.bf16.mxu0 0
        %1411 = vmatmul.mubr.bf16.gmra.mxu0 %v1138
        %v1412 = vpop.f32.mrf.mxu0
        %v1413 = vadd.f32 %v1023, %v1412
        %v1414 = vpop.f32.mrf.mxu0
        %v1415 = vpop.f32.mrf.mxu0
        %v1416 = vadd.f32 %v1023, %v1415
        %v1417 = vpop.f32.mrf.mxu0
        %1418 = vmatprep.mubr.bf16.mxu0 0
        %1419 = vmatmul.mubr.bf16.gmra.mxu0 %v1141
        %v1420 = vpop.f32.mrf.mxu0
        %v1421 = vadd.f32 %v1023, %v1420
        %v1422 = vpop.f32.mrf.mxu0
        %v1423 = vpop.f32.mrf.mxu0
        %v1424 = vadd.f32 %v1023, %v1423
        %v1425 = vpop.f32.mrf.mxu0
        %1426 = vmatprep.mubr.bf16.mxu0 0
        %1427 = vmatmul.mubr.bf16.gmra.mxu0 %v1144
        %v1428 = vpop.f32.mrf.mxu0
        %v1429 = vadd.f32 %v1023, %v1428
        %v1430 = vpop.f32.mrf.mxu0
        %v1431 = vpop.f32.mrf.mxu0
        %v1432 = vadd.f32 %v1023, %v1431
        %v1433 = vpop.f32.mrf.mxu0
        %1434 = vdwg.mxu0
        %v1435 = vtanh.pop %v1181
        %v1436 = vtanh.pop %v1184
        %v1437 = vtanh.pop %v1189
        %v1438 = vtanh.pop %v1192
        %v1439 = vtanh.pop %v1197
        %v1440 = vtanh.pop %v1200
        %v1441 = vtanh.pop %v1205
        %v1442 = vtanh.pop %v1208
        %v1443 = vtanh.pop %v1213
        %v1444 = vtanh.pop %v1216
        %v1445 = vtanh.pop %v1221
        %v1446 = vtanh.pop %v1224
        %v1447 = vtanh.pop %v1229
        %v1448 = vtanh.pop %v1232
        %v1449 = vtanh.pop %v1237
        %v1450 = vtanh.pop %v1240
        %v1451 = vtanh.pop %v1245
        %v1452 = vtanh.pop %v1248
        %v1453 = vtanh.pop %v1253
        %v1454 = vtanh.pop %v1256
        %v1455 = vtanh.pop %v1261
        %v1456 = vtanh.pop %v1264
        %v1457 = vtanh.pop %v1269
        %v1458 = vtanh.pop %v1272
        %v1459 = vtanh.pop %v1277
        %v1460 = vtanh.pop %v1280
        %v1461 = vtanh.pop %v1285
        %v1462 = vtanh.pop %v1288
        %v1463 = vtanh.pop %v1293
        %v1464 = vtanh.pop %v1296
        %v1465 = vtanh.pop %v1301
        %v1466 = vtanh.pop %v1304
        %v1467 = vtanh.pop %v1309
        %v1468 = vtanh.pop %v1312
        %v1469 = vtanh.pop %v1317
        %v1470 = vtanh.pop %v1320
        %v1471 = vtanh.pop %v1325
        %v1472 = vtanh.pop %v1328
        %v1473 = vtanh.pop %v1333
        %v1474 = vtanh.pop %v1336
        %v1475 = vtanh.pop %v1341
        %v1476 = vtanh.pop %v1344
        %v1477 = vtanh.pop %v1349
        %v1478 = vtanh.pop %v1352
        %v1479 = vtanh.pop %v1357
        %v1480 = vtanh.pop %v1360
        %v1481 = vtanh.pop %v1365
        %v1482 = vtanh.pop %v1368
        %v1483 = vtanh.pop %v1373
        %v1484 = vtanh.pop %v1376
        %v1485 = vtanh.pop %v1381
        %v1486 = vtanh.pop %v1384
        %v1487 = vtanh.pop %v1389
        %v1488 = vtanh.pop %v1392
        %v1489 = vtanh.pop %v1397
        %v1490 = vtanh.pop %v1400
        %v1491 = vtanh.pop %v1405
        %v1492 = vtanh.pop %v1408
        %v1493 = vtanh.pop %v1413
        %v1494 = vtanh.pop %v1416
        %v1495 = vtanh.pop %v1421
        %v1496 = vtanh.pop %v1424
        %v1497 = vtanh.pop %v1429
        %v1498 = vtanh.pop %v1432
        %v1499 = vpack.c.bf16 %v1436, %v1435
        %v1500 = vpack.c.bf16 %v1438, %v1437
        %v1501 = vpack.c.bf16 %v1440, %v1439
        %v1502 = vpack.c.bf16 %v1442, %v1441
        %v1503 = vpack.c.bf16 %v1444, %v1443
        %v1504 = vpack.c.bf16 %v1446, %v1445
        %v1505 = vpack.c.bf16 %v1448, %v1447
        %v1506 = vpack.c.bf16 %v1450, %v1449
        %v1507 = vpack.c.bf16 %v1452, %v1451
        %v1508 = vpack.c.bf16 %v1454, %v1453
        %v1509 = vpack.c.bf16 %v1456, %v1455
        %v1510 = vpack.c.bf16 %v1458, %v1457
        %v1511 = vpack.c.bf16 %v1460, %v1459
        %v1512 = vpack.c.bf16 %v1462, %v1461
        %v1513 = vpack.c.bf16 %v1464, %v1463
        %v1514 = vpack.c.bf16 %v1466, %v1465
        %v1515 = vpack.c.bf16 %v1468, %v1467
        %v1516 = vpack.c.bf16 %v1470, %v1469
        %v1517 = vpack.c.bf16 %v1472, %v1471
        %v1518 = vpack.c.bf16 %v1474, %v1473
        %v1519 = vpack.c.bf16 %v1476, %v1475
        %v1520 = vpack.c.bf16 %v1478, %v1477
        %v1521 = vpack.c.bf16 %v1480, %v1479
        %v1522 = vpack.c.bf16 %v1482, %v1481
        %v1523 = vpack.c.bf16 %v1484, %v1483
        %v1524 = vpack.c.bf16 %v1486, %v1485
        %v1525 = vpack.c.bf16 %v1488, %v1487
        %v1526 = vpack.c.bf16 %v1490, %v1489
        %v1527 = vpack.c.bf16 %v1492, %v1491
        %v1528 = vpack.c.bf16 %v1494, %v1493
        %v1529 = vpack.c.bf16 %v1496, %v1495
        %v1530 = vpack.c.bf16 %v1498, %v1497
        %v1531 = vld [vmem:[%s5] sm:$0xf]
        %v1532 = vld [vmem:[%s5 + $0x4] sm:$0xf]
        %v1533 = vld [vmem:[%s5 + $0x8] sm:$0xf]
        %v1534 = vld [vmem:[%s5 + $0xc] sm:$0xf]
        %v1535 = vld [vmem:[%s5 + $0x10] sm:$0xf]
        %v1536 = vld [vmem:[%s5 + $0x14] sm:$0xf]
        %v1537 = vld [vmem:[%s5 + $0x18] sm:$0xf]
        %v1538 = vld [vmem:[%s5 + $0x1c] sm:$0xf]
        %v1539 = vld [vmem:[%s6] sm:$0x1]
        %v1541 = vlaneseq
        %v1542 = vshrl.u32 %v1541, 7
        %v1543 = vsub.s32 0, %v1542
        %v1544 = vrot.slane %v1539, %v1543
        %v1554 = vunpack.c.l.b16 %v1531
        %v1555 = vunpack.c.l.b16 %v1532
        %v1556 = vunpack.c.l.b16 %v1533
        %v1557 = vunpack.c.l.b16 %v1534
        %v1558 = vunpack.c.l.b16 %v1535
        %v1559 = vunpack.c.l.b16 %v1536
        %v1560 = vunpack.c.l.b16 %v1537
        %v1561 = vunpack.c.l.b16 %v1538
        %v1562 = vpack.c.b16 %v1555, %v1554
        %v1563 = vpack.c.b16 %v1557, %v1556
        %v1564 = vpack.c.b16 %v1559, %v1558
        %v1565 = vpack.c.b16 %v1561, %v1560
        %v1571 = vsel %vm1049, %v1499, 0
        %v1574 = vsel %vm1049, %v1500, 0
        %v1577 = vsel %vm1049, %v1501, 0
        %v1580 = vsel %vm1049, %v1502, 0
        %v1583 = vsel %vm1049, %v1503, 0
        %v1586 = vsel %vm1049, %v1504, 0
        %v1589 = vsel %vm1049, %v1505, 0
        %v1592 = vsel %vm1049, %v1506, 0
        %v1595 = vsel %vm1049, %v1507, 0
        %v1598 = vsel %vm1049, %v1508, 0
        %v1601 = vsel %vm1049, %v1509, 0
        %v1604 = vsel %vm1049, %v1510, 0
        %v1607 = vsel %vm1049, %v1511, 0
        %v1610 = vsel %vm1049, %v1512, 0
        %v1613 = vsel %vm1049, %v1513, 0
        %v1616 = vsel %vm1049, %v1514, 0
        %v1619 = vsel %vm1049, %v1515, 0
        %v1622 = vsel %vm1049, %v1516, 0
        %v1625 = vsel %vm1049, %v1517, 0
        %v1628 = vsel %vm1049, %v1518, 0
        %v1631 = vsel %vm1049, %v1519, 0
        %v1634 = vsel %vm1049, %v1520, 0
        %v1637 = vsel %vm1049, %v1521, 0
        %v1640 = vsel %vm1049, %v1522, 0
        %v1643 = vsel %vm1049, %v1523, 0
        %v1646 = vsel %vm1049, %v1524, 0
        %v1649 = vsel %vm1049, %v1525, 0
        %v1652 = vsel %vm1049, %v1526, 0
        %v1655 = vsel %vm1049, %v1527, 0
        %v1658 = vsel %vm1049, %v1528, 0
        %v1661 = vsel %vm1049, %v1529, 0
        %v1664 = vsel %vm1049, %v1530, 0
        %1666 = vmatprep.subr.bf16.mxu0 0
        %1667 = vmatpush1.bf16.msra.mxu0 0
        %1668 = vmatprep.subr.bf16.mxu0 0
        %1669 = vmatpush1.bf16.msra.mxu0 0
        %1670 = vmatprep.subr.bf16.mxu0 0
        %1671 = vmatpush1.bf16.msra.mxu0 0
        %1672 = vmatprep.subr.bf16.mxu0 0
        %1673 = vmatpush1.bf16.msra.mxu0 0
        %1674 = vmatprep.subr.bf16.mxu0 0
        %1675 = vmatpush1.bf16.msra.mxu0 %v1565
        %1676 = vmatprep.subr.bf16.mxu0 0
        %1677 = vmatpush1.bf16.msra.mxu0 %v1564
        %1678 = vmatprep.subr.bf16.mxu0 0
        %1679 = vmatpush1.bf16.msra.mxu0 %v1563
        %1680 = vmatprep.subr.bf16.mxu0 0
        %1681 = vmatpush1.bf16.msra.mxu0 %v1562
        %1682 = vmatprep.subr.bf16.mxu0 0
        %1683 = vmatpush2.bf16.msra.mxu0 0
        %1684 = vmatprep.subr.bf16.mxu0 0
        %1685 = vmatpush2.bf16.msra.mxu0 0
        %1686 = vmatprep.subr.bf16.mxu0 0
        %1687 = vmatpush2.bf16.msra.mxu0 0
        %1688 = vmatprep.subr.bf16.mxu0 0
        %1689 = vmatpush2.bf16.msra.mxu0 0
        %1690 = vmatprep.subr.bf16.mxu0 0
        %1691 = vmatpush2.bf16.msra.mxu0 0
        %1692 = vmatprep.subr.bf16.mxu0 0
        %1693 = vmatpush2.bf16.msra.mxu0 0
        %1694 = vmatprep.subr.bf16.mxu0 0
        %1695 = vmatpush2.bf16.msra.mxu0 0
        %1696 = vmatprep.subr.bf16.mxu0 0
        %1697 = vmatpush2.bf16.msra.mxu0 0
        %1698 = vmatprep.mubr.bf16.mxu0 0
        %1699 = vmatmul.mubr.bf16.gmra.mxu0 %v1571
        %v1700 = vpop.f32.mrf.mxu0
        %v1701 = vadd.f32 %v1544, %v1700
        %v1702 = vpop.f32.mrf.mxu0
        %v1703 = vpop.f32.mrf.mxu0
        %v1704 = vadd.f32 %v1544, %v1703
        %v1705 = vpop.f32.mrf.mxu0
        %1706 = vmatprep.mubr.bf16.mxu0 0
        %1707 = vmatmul.mubr.bf16.gmra.mxu0 %v1574
        %v1708 = vpop.f32.mrf.mxu0
        %v1709 = vadd.f32 %v1544, %v1708
        %v1710 = vpop.f32.mrf.mxu0
        %v1711 = vpop.f32.mrf.mxu0
        %v1712 = vadd.f32 %v1544, %v1711
        %v1713 = vpop.f32.mrf.mxu0
        %1714 = vmatprep.mubr.bf16.mxu0 0
        %1715 = vmatmul.mubr.bf16.gmra.mxu0 %v1577
        %v1716 = vpop.f32.mrf.mxu0
        %v1717 = vadd.f32 %v1544, %v1716
        %v1718 = vpop.f32.mrf.mxu0
        %v1719 = vpop.f32.mrf.mxu0
        %v1720 = vadd.f32 %v1544, %v1719
        %v1721 = vpop.f32.mrf.mxu0
        %1722 = vmatprep.mubr.bf16.mxu0 0
        %1723 = vmatmul.mubr.bf16.gmra.mxu0 %v1580
        %v1724 = vpop.f32.mrf.mxu0
        %v1725 = vadd.f32 %v1544, %v1724
        %v1726 = vpop.f32.mrf.mxu0
        %v1727 = vpop.f32.mrf.mxu0
        %v1728 = vadd.f32 %v1544, %v1727
        %v1729 = vpop.f32.mrf.mxu0
        %1730 = vmatprep.mubr.bf16.mxu0 0
        %1731 = vmatmul.mubr.bf16.gmra.mxu0 %v1583
        %v1732 = vpop.f32.mrf.mxu0
        %v1733 = vadd.f32 %v1544, %v1732
        %v1734 = vpop.f32.mrf.mxu0
        %v1735 = vpop.f32.mrf.mxu0
        %v1736 = vadd.f32 %v1544, %v1735
        %v1737 = vpop.f32.mrf.mxu0
        %1738 = vmatprep.mubr.bf16.mxu0 0
        %1739 = vmatmul.mubr.bf16.gmra.mxu0 %v1586
        %v1740 = vpop.f32.mrf.mxu0
        %v1741 = vadd.f32 %v1544, %v1740
        %v1742 = vpop.f32.mrf.mxu0
        %v1743 = vpop.f32.mrf.mxu0
        %v1744 = vadd.f32 %v1544, %v1743
        %v1745 = vpop.f32.mrf.mxu0
        %1746 = vmatprep.mubr.bf16.mxu0 0
        %1747 = vmatmul.mubr.bf16.gmra.mxu0 %v1589
        %v1748 = vpop.f32.mrf.mxu0
        %v1749 = vadd.f32 %v1544, %v1748
        %v1750 = vpop.f32.mrf.mxu0
        %v1751 = vpop.f32.mrf.mxu0
        %v1752 = vadd.f32 %v1544, %v1751
        %v1753 = vpop.f32.mrf.mxu0
        %1754 = vmatprep.mubr.bf16.mxu0 0
        %1755 = vmatmul.mubr.bf16.gmra.mxu0 %v1592
        %v1756 = vpop.f32.mrf.mxu0
        %v1757 = vadd.f32 %v1544, %v1756
        %v1758 = vpop.f32.mrf.mxu0
        %v1759 = vpop.f32.mrf.mxu0
        %v1760 = vadd.f32 %v1544, %v1759
        %v1761 = vpop.f32.mrf.mxu0
        %1762 = vmatprep.mubr.bf16.mxu0 0
        %1763 = vmatmul.mubr.bf16.gmra.mxu0 %v1595
        %v1764 = vpop.f32.mrf.mxu0
        %v1765 = vadd.f32 %v1544, %v1764
        %v1766 = vpop.f32.mrf.mxu0
        %v1767 = vpop.f32.mrf.mxu0
        %v1768 = vadd.f32 %v1544, %v1767
        %v1769 = vpop.f32.mrf.mxu0
        %1770 = vmatprep.mubr.bf16.mxu0 0
        %1771 = vmatmul.mubr.bf16.gmra.mxu0 %v1598
        %v1772 = vpop.f32.mrf.mxu0
        %v1773 = vadd.f32 %v1544, %v1772
        %v1774 = vpop.f32.mrf.mxu0
        %v1775 = vpop.f32.mrf.mxu0
        %v1776 = vadd.f32 %v1544, %v1775
        %v1777 = vpop.f32.mrf.mxu0
        %1778 = vmatprep.mubr.bf16.mxu0 0
        %1779 = vmatmul.mubr.bf16.gmra.mxu0 %v1601
        %v1780 = vpop.f32.mrf.mxu0
        %v1781 = vadd.f32 %v1544, %v1780
        %v1782 = vpop.f32.mrf.mxu0
        %v1783 = vpop.f32.mrf.mxu0
        %v1784 = vadd.f32 %v1544, %v1783
        %v1785 = vpop.f32.mrf.mxu0
        %1786 = vmatprep.mubr.bf16.mxu0 0
        %1787 = vmatmul.mubr.bf16.gmra.mxu0 %v1604
        %v1788 = vpop.f32.mrf.mxu0
        %v1789 = vadd.f32 %v1544, %v1788
        %v1790 = vpop.f32.mrf.mxu0
        %v1791 = vpop.f32.mrf.mxu0
        %v1792 = vadd.f32 %v1544, %v1791
        %v1793 = vpop.f32.mrf.mxu0
        %1794 = vmatprep.mubr.bf16.mxu0 0
        %1795 = vmatmul.mubr.bf16.gmra.mxu0 %v1607
        %v1796 = vpop.f32.mrf.mxu0
        %v1797 = vadd.f32 %v1544, %v1796
        %v1798 = vpop.f32.mrf.mxu0
        %v1799 = vpop.f32.mrf.mxu0
        %v1800 = vadd.f32 %v1544, %v1799
        %v1801 = vpop.f32.mrf.mxu0
        %1802 = vmatprep.mubr.bf16.mxu0 0
        %1803 = vmatmul.mubr.bf16.gmra.mxu0 %v1610
        %v1804 = vpop.f32.mrf.mxu0
        %v1805 = vadd.f32 %v1544, %v1804
        %v1806 = vpop.f32.mrf.mxu0
        %v1807 = vpop.f32.mrf.mxu0
        %v1808 = vadd.f32 %v1544, %v1807
        %v1809 = vpop.f32.mrf.mxu0
        %1810 = vmatprep.mubr.bf16.mxu0 0
        %1811 = vmatmul.mubr.bf16.gmra.mxu0 %v1613
        %v1812 = vpop.f32.mrf.mxu0
        %v1813 = vadd.f32 %v1544, %v1812
        %v1814 = vpop.f32.mrf.mxu0
        %v1815 = vpop.f32.mrf.mxu0
        %v1816 = vadd.f32 %v1544, %v1815
        %v1817 = vpop.f32.mrf.mxu0
        %1818 = vmatprep.mubr.bf16.mxu0 0
        %1819 = vmatmul.mubr.bf16.gmra.mxu0 %v1616
        %v1820 = vpop.f32.mrf.mxu0
        %v1821 = vadd.f32 %v1544, %v1820
        %v1822 = vpop.f32.mrf.mxu0
        %v1823 = vpop.f32.mrf.mxu0
        %v1824 = vadd.f32 %v1544, %v1823
        %v1825 = vpop.f32.mrf.mxu0
        %1826 = vmatprep.mubr.bf16.mxu0 0
        %1827 = vmatmul.mubr.bf16.gmra.mxu0 %v1619
        %v1828 = vpop.f32.mrf.mxu0
        %v1829 = vadd.f32 %v1544, %v1828
        %v1830 = vpop.f32.mrf.mxu0
        %v1831 = vpop.f32.mrf.mxu0
        %v1832 = vadd.f32 %v1544, %v1831
        %v1833 = vpop.f32.mrf.mxu0
        %1834 = vmatprep.mubr.bf16.mxu0 0
        %1835 = vmatmul.mubr.bf16.gmra.mxu0 %v1622
        %v1836 = vpop.f32.mrf.mxu0
        %v1837 = vadd.f32 %v1544, %v1836
        %v1838 = vpop.f32.mrf.mxu0
        %v1839 = vpop.f32.mrf.mxu0
        %v1840 = vadd.f32 %v1544, %v1839
        %v1841 = vpop.f32.mrf.mxu0
        %1842 = vmatprep.mubr.bf16.mxu0 0
        %1843 = vmatmul.mubr.bf16.gmra.mxu0 %v1625
        %v1844 = vpop.f32.mrf.mxu0
        %v1845 = vadd.f32 %v1544, %v1844
        %v1846 = vpop.f32.mrf.mxu0
        %v1847 = vpop.f32.mrf.mxu0
        %v1848 = vadd.f32 %v1544, %v1847
        %v1849 = vpop.f32.mrf.mxu0
        %1850 = vmatprep.mubr.bf16.mxu0 0
        %1851 = vmatmul.mubr.bf16.gmra.mxu0 %v1628
        %v1852 = vpop.f32.mrf.mxu0
        %v1853 = vadd.f32 %v1544, %v1852
        %v1854 = vpop.f32.mrf.mxu0
        %v1855 = vpop.f32.mrf.mxu0
        %v1856 = vadd.f32 %v1544, %v1855
        %v1857 = vpop.f32.mrf.mxu0
        %1858 = vmatprep.mubr.bf16.mxu0 0
        %1859 = vmatmul.mubr.bf16.gmra.mxu0 %v1631
        %v1860 = vpop.f32.mrf.mxu0
        %v1861 = vadd.f32 %v1544, %v1860
        %v1862 = vpop.f32.mrf.mxu0
        %v1863 = vpop.f32.mrf.mxu0
        %v1864 = vadd.f32 %v1544, %v1863
        %v1865 = vpop.f32.mrf.mxu0
        %1866 = vmatprep.mubr.bf16.mxu0 0
        %1867 = vmatmul.mubr.bf16.gmra.mxu0 %v1634
        %v1868 = vpop.f32.mrf.mxu0
        %v1869 = vadd.f32 %v1544, %v1868
        %v1870 = vpop.f32.mrf.mxu0
        %v1871 = vpop.f32.mrf.mxu0
        %v1872 = vadd.f32 %v1544, %v1871
        %v1873 = vpop.f32.mrf.mxu0
        %1874 = vmatprep.mubr.bf16.mxu0 0
        %1875 = vmatmul.mubr.bf16.gmra.mxu0 %v1637
        %v1876 = vpop.f32.mrf.mxu0
        %v1877 = vadd.f32 %v1544, %v1876
        %v1878 = vpop.f32.mrf.mxu0
        %v1879 = vpop.f32.mrf.mxu0
        %v1880 = vadd.f32 %v1544, %v1879
        %v1881 = vpop.f32.mrf.mxu0
        %1882 = vmatprep.mubr.bf16.mxu0 0
        %1883 = vmatmul.mubr.bf16.gmra.mxu0 %v1640
        %v1884 = vpop.f32.mrf.mxu0
        %v1885 = vadd.f32 %v1544, %v1884
        %v1886 = vpop.f32.mrf.mxu0
        %v1887 = vpop.f32.mrf.mxu0
        %v1888 = vadd.f32 %v1544, %v1887
        %v1889 = vpop.f32.mrf.mxu0
        %1890 = vmatprep.mubr.bf16.mxu0 0
        %1891 = vmatmul.mubr.bf16.gmra.mxu0 %v1643
        %v1892 = vpop.f32.mrf.mxu0
        %v1893 = vadd.f32 %v1544, %v1892
        %v1894 = vpop.f32.mrf.mxu0
        %v1895 = vpop.f32.mrf.mxu0
        %v1896 = vadd.f32 %v1544, %v1895
        %v1897 = vpop.f32.mrf.mxu0
        %1898 = vmatprep.mubr.bf16.mxu0 0
        %1899 = vmatmul.mubr.bf16.gmra.mxu0 %v1646
        %v1900 = vpop.f32.mrf.mxu0
        %v1901 = vadd.f32 %v1544, %v1900
        %v1902 = vpop.f32.mrf.mxu0
        %v1903 = vpop.f32.mrf.mxu0
        %v1904 = vadd.f32 %v1544, %v1903
        %v1905 = vpop.f32.mrf.mxu0
        %1906 = vmatprep.mubr.bf16.mxu0 0
        %1907 = vmatmul.mubr.bf16.gmra.mxu0 %v1649
        %v1908 = vpop.f32.mrf.mxu0
        %v1909 = vadd.f32 %v1544, %v1908
        %v1910 = vpop.f32.mrf.mxu0
        %v1911 = vpop.f32.mrf.mxu0
        %v1912 = vadd.f32 %v1544, %v1911
        %v1913 = vpop.f32.mrf.mxu0
        %1914 = vmatprep.mubr.bf16.mxu0 0
        %1915 = vmatmul.mubr.bf16.gmra.mxu0 %v1652
        %v1916 = vpop.f32.mrf.mxu0
        %v1917 = vadd.f32 %v1544, %v1916
        %v1918 = vpop.f32.mrf.mxu0
        %v1919 = vpop.f32.mrf.mxu0
        %v1920 = vadd.f32 %v1544, %v1919
        %v1921 = vpop.f32.mrf.mxu0
        %1922 = vmatprep.mubr.bf16.mxu0 0
        %1923 = vmatmul.mubr.bf16.gmra.mxu0 %v1655
        %v1924 = vpop.f32.mrf.mxu0
        %v1925 = vadd.f32 %v1544, %v1924
        %v1926 = vpop.f32.mrf.mxu0
        %v1927 = vpop.f32.mrf.mxu0
        %v1928 = vadd.f32 %v1544, %v1927
        %v1929 = vpop.f32.mrf.mxu0
        %1930 = vmatprep.mubr.bf16.mxu0 0
        %1931 = vmatmul.mubr.bf16.gmra.mxu0 %v1658
        %v1932 = vpop.f32.mrf.mxu0
        %v1933 = vadd.f32 %v1544, %v1932
        %v1934 = vpop.f32.mrf.mxu0
        %v1935 = vpop.f32.mrf.mxu0
        %v1936 = vadd.f32 %v1544, %v1935
        %v1937 = vpop.f32.mrf.mxu0
        %1938 = vmatprep.mubr.bf16.mxu0 0
        %1939 = vmatmul.mubr.bf16.gmra.mxu0 %v1661
        %v1940 = vpop.f32.mrf.mxu0
        %v1941 = vadd.f32 %v1544, %v1940
        %v1942 = vpop.f32.mrf.mxu0
        %v1943 = vpop.f32.mrf.mxu0
        %v1944 = vadd.f32 %v1544, %v1943
        %v1945 = vpop.f32.mrf.mxu0
        %1946 = vmatprep.mubr.bf16.mxu0 0
        %1947 = vmatmul.mubr.bf16.gmra.mxu0 %v1664
        %v1948 = vpop.f32.mrf.mxu0
        %v1949 = vadd.f32 %v1544, %v1948
        %v1950 = vpop.f32.mrf.mxu0
        %v1951 = vpop.f32.mrf.mxu0
        %v1952 = vadd.f32 %v1544, %v1951
        %v1953 = vpop.f32.mrf.mxu0
        %1954 = vdwg.mxu0
        %1955 = vst [vmem:[%s272] sm:$0xff] %v1701
        %1956 = vst [vmem:[%s272 + $0x8] sm:$0xff] %v1704
        %1957 = vst [vmem:[%s272 + $0x10] sm:$0xff] %v1709
        %1958 = vst [vmem:[%s272 + $0x18] sm:$0xff] %v1712
        %1959 = vst [vmem:[%s272 + $0x20] sm:$0xff] %v1717
        %1960 = vst [vmem:[%s272 + $0x28] sm:$0xff] %v1720
        %1961 = vst [vmem:[%s272 + $0x30] sm:$0xff] %v1725
        %1962 = vst [vmem:[%s272 + $0x38] sm:$0xff] %v1728
        %1963 = vst [vmem:[%s272 + $0x40] sm:$0xff] %v1733
        %1964 = vst [vmem:[%s272 + $0x48] sm:$0xff] %v1736
        %1965 = vst [vmem:[%s272 + $0x50] sm:$0xff] %v1741
        %1966 = vst [vmem:[%s272 + $0x58] sm:$0xff] %v1744
        %1967 = vst [vmem:[%s272 + $0x60] sm:$0xff] %v1749
        %1968 = vst [vmem:[%s272 + $0x68] sm:$0xff] %v1752
        %1969 = vst [vmem:[%s272 + $0x70] sm:$0xff] %v1757
        %1970 = vst [vmem:[%s272 + $0x78] sm:$0xff] %v1760
        %1971 = vst [vmem:[%s272 + $0x80] sm:$0xff] %v1765
        %1972 = vst [vmem:[%s272 + $0x88] sm:$0xff] %v1768
        %1973 = vst [vmem:[%s272 + $0x90] sm:$0xff] %v1773
        %1974 = vst [vmem:[%s272 + $0x98] sm:$0xff] %v1776
        %1975 = vst [vmem:[%s272 + $0xa0] sm:$0xff] %v1781
        %1976 = vst [vmem:[%s272 + $0xa8] sm:$0xff] %v1784
        %1977 = vst [vmem:[%s272 + $0xb0] sm:$0xff] %v1789
        %1978 = vst [vmem:[%s272 + $0xb8] sm:$0xff] %v1792
        %1979 = vst [vmem:[%s272 + $0xc0] sm:$0xff] %v1797
        %1980 = vst [vmem:[%s272 + $0xc8] sm:$0xff] %v1800
        %1981 = vst [vmem:[%s272 + $0xd0] sm:$0xff] %v1805
        %1982 = vst [vmem:[%s272 + $0xd8] sm:$0xff] %v1808
        %1983 = vst [vmem:[%s272 + $0xe0] sm:$0xff] %v1813
        %1984 = vst [vmem:[%s272 + $0xe8] sm:$0xff] %v1816
        %1985 = vst [vmem:[%s272 + $0xf0] sm:$0xff] %v1821
        %1986 = vst [vmem:[%s272 + $0xf8] sm:$0xff] %v1824
        %1987 = vst [vmem:[%s272 + $0x100] sm:$0xff] %v1829
        %1988 = vst [vmem:[%s272 + $0x108] sm:$0xff] %v1832
        %1989 = vst [vmem:[%s272 + $0x110] sm:$0xff] %v1837
        %1990 = vst [vmem:[%s272 + $0x118] sm:$0xff] %v1840
        %1991 = vst [vmem:[%s272 + $0x120] sm:$0xff] %v1845
        %1992 = vst [vmem:[%s272 + $0x128] sm:$0xff] %v1848
        %1993 = vst [vmem:[%s272 + $0x130] sm:$0xff] %v1853
        %1994 = vst [vmem:[%s272 + $0x138] sm:$0xff] %v1856
        %1995 = vst [vmem:[%s272 + $0x140] sm:$0xff] %v1861
        %1996 = vst [vmem:[%s272 + $0x148] sm:$0xff] %v1864
        %1997 = vst [vmem:[%s272 + $0x150] sm:$0xff] %v1869
        %1998 = vst [vmem:[%s272 + $0x158] sm:$0xff] %v1872
        %1999 = vst [vmem:[%s272 + $0x160] sm:$0xff] %v1877
        %2000 = vst [vmem:[%s272 + $0x168] sm:$0xff] %v1880
        %2001 = vst [vmem:[%s272 + $0x170] sm:$0xff] %v1885
        %2002 = vst [vmem:[%s272 + $0x178] sm:$0xff] %v1888
        %2003 = vst [vmem:[%s272 + $0x180] sm:$0xff] %v1893
        %2004 = vst [vmem:[%s272 + $0x188] sm:$0xff] %v1896
        %2005 = vst [vmem:[%s272 + $0x190] sm:$0xff] %v1901
        %2006 = vst [vmem:[%s272 + $0x198] sm:$0xff] %v1904
        %2007 = vst [vmem:[%s272 + $0x1a0] sm:$0xff] %v1909
        %2008 = vst [vmem:[%s272 + $0x1a8] sm:$0xff] %v1912
        %2009 = vst [vmem:[%s272 + $0x1b0] sm:$0xff] %v1917
        %2010 = vst [vmem:[%s272 + $0x1b8] sm:$0xff] %v1920
        %2011 = vst [vmem:[%s272 + $0x1c0] sm:$0xff] %v1925
        %2012 = vst [vmem:[%s272 + $0x1c8] sm:$0xff] %v1928
        %2013 = vst [vmem:[%s272 + $0x1d0] sm:$0xff] %v1933
        %2014 = vst [vmem:[%s272 + $0x1d8] sm:$0xff] %v1936
        %2015 = vst [vmem:[%s272 + $0x1e0] sm:$0xff] %v1941
        %2016 = vst [vmem:[%s272 + $0x1e8] sm:$0xff] %v1944
        %2017 = vst [vmem:[%s272 + $0x1f0] sm:$0xff] %v1949
        %2018 = vst [vmem:[%s272 + $0x1f8] sm:$0xff] %v1952
        %s2019 = sand.u32 %s181, 1
        %s2020 = scalar_lea.sflag [#allocation3], %s2019
        %s2021 = sand.u32 %s181, 1
        %s2022 = smul.addr %s2021, 512
        %s2023 = scalar_lea.vmem [#allocation2], %s2022
        // Predicated region
        $region49: #{tpu_custom_call.1} parent=47 // pred_check
          %p2024 = pneg %p191
        $region50: #{tpu_custom_call.1} parent=47 // pred_check_branch
          %2026 = sbr.rel (%p2024) target = $region52
        $region51: #{tpu_custom_call.1} parent=47 // pred_region
          %s2027 = smul.u32 64, %s21
          %s2029 = ssub.s32 8192, 8192
          %2030 = vsyncadd %s2020, %s2029
          %s2031 = smul.addr %s2027, 128
          %s2032 = scalar_lea.hbm %s7, %s2031
          %s2033 = sshll.u32 %s2023, 4
          %s2034 = int_to_ptr.vmem [resolvable:$true] %s2033
          %2039 = dma.vmem_to_hbm [thread:$0]  %s2034, 8192, %s2032, %s2020, 128, 128, 8
        $region52: #{tpu_custom_call.1} parent=47 // pred_fallthru
          _
      $region48: #{tpu_custom_call.1} parent=5 // pred_fallthru
        _
      %p2040 = scmp.le.s32.totalorder 2, %s16
      // Predicated region
      $region53: #{tpu_custom_call.1} parent=5 // pred_check
        %p2041 = pneg %p2040
      $region54: #{tpu_custom_call.1} parent=5 // pred_check_branch
        %2043 = sbr.rel (%p2041) target = $region56
      $region55: #{tpu_custom_call.1} parent=5 // pred_region
        %s2044 = ssub.s32 %s16, 2
        // Predicated region
        $region57: #{tpu_custom_call.1} parent=55 // pred_check
          %p2045 = pneg %p197
        $region58: #{tpu_custom_call.1} parent=55 // pred_check_branch
          %2047 = sbr.rel (%p2045) target = $region60
        $region59: #{tpu_custom_call.1} parent=55 // pred_region
          %s2048 = sand.u32 %s182, 1
          %s2049 = scalar_lea.sflag [#allocation3], %s2048
          %s2050 = sand.u32 %s182, 1
          %s2051 = smul.addr %s2050, 512
          %s2052 = scalar_lea.vmem [#allocation2], %s2051
          %2053 = dma.done %s2049, 8192
        $region60: #{tpu_custom_call.1} parent=55 // pred_fallthru
          _
      $region56: #{tpu_custom_call.1} parent=5 // pred_fallthru
        _
    $region6: #{tpu_custom_call.1} parent=1 // loop_footer
      %s20 = sadd.s32 1, %s16
    $region7: #{tpu_custom_call.1} parent=1 // loop_footer_branch
      %15 = sbr.rel target = $region3
    $region8: #{tpu_custom_call.1} parent=1 // loop_exit
      _
    %2054 = vsyncpa [#allocation3], 1
    %s2055 = scalar_lea.sflag [#allocation3], 1
    %2056 = vsyncpa %s2055, 1

</llo_original>
